<compile_context>
chip_gen: v7x
topology: tpu7x:2x2x1
jax: 0.10.0
libtpu: 0.0.40
codegen_flags: <defaults>
</compile_context>

<pallas_src>
import functools

import jax
import jax.numpy as jnp
from jax import lax
from jax.experimental import pallas as pl
from jax.experimental.pallas import tpu as pltpu


def depthwise_block_kernel(x_ref, mask_ref, dw_ref, vec_ref, w1_ref, w2s_ref,
                           out_ref, *, H, W, Wp, K, pad, eps, S, Bblk):
    """One batch-block (Bblk samples) per grid step.

    x_ref   : (Cin, Bblk*S)     zero-padded images, per-sample flat i = y*Wp+x
    mask_ref: (1, S)            1.0 where local i is a valid output pixel
    dw_ref  : (Cin, K*K)        depthwise taps, tap t = dy*K + dx
    vec_ref : (Cmax, 5)         packed columns: dwb, gamma, beta, b1, b2+bs
    w1_ref  : (Cmid, Cin)       pointwise1 weight
    w2s_ref : (Cout, Cmid+Cin)  [pointwise2 | skip] merged weight
    """
    Cin = x_ref.shape[0]
    N = x_ref.shape[1]                  # Bblk * S
    Cmid = w1_ref.shape[0]
    Cout = w2s_ref.shape[0]

    xpf = x_ref[...]                    # (Cin, N)
    dw = dw_ref[...]                    # (Cin, K*K)
    vec = vec_ref[...]                  # (Cmax, 5)
    maskf = mask_ref[...]               # (1, S)

    dwb   = vec[0:Cin, 0:1]             # (Cin, 1)
    gamma = vec[0:Cin, 1:2]
    beta  = vec[0:Cin, 2:3]
    b1    = vec[0:Cmid, 3:4]            # (Cmid, 1)
    b2s   = vec[0:Cout, 4:5]            # (Cout, 1)  (= b2 + bs)

    # ---- depthwise KxK conv with factored lane-rolls (XLU slot, co-issues
    # with VPU FMAs).  c_dx = read-ahead by dx columns; q_dy = row of taps;
    # then one roll by dy*Wp per row.  Valid output pixels never wrap across
    # sample chunks (j + (K-1)*(Wp+1) < S).
    cols = [xpf]
    for dx in range(1, K):
        cols.append(pltpu.roll(xpf, shift=N - dx, axis=1))
    acc = None
    for dy in range(K):
        q = cols[0] * dw[:, dy * K:dy * K + 1]
        for dx in range(1, K):
            t = dy * K + dx
            q = q + cols[dx] * dw[:, t:t + 1]
        if dy:
            q = pltpu.roll(q, shift=N - dy * Wp, axis=1)
        acc = q if acc is None else acc + q
    acc = acc + dwb

    # residual pixels for the skip 1x1 conv (centered, un-padded image)
    k_res = pad * Wp + pad
    res = xpf if k_res == 0 else pltpu.roll(xpf, shift=N - k_res, axis=1)

    # ---- GroupNorm(num_groups=1): per-sample masked stats on tile-aligned
    # S-chunks (two-pass / shifted variance), fused scale+shift FMA.
    inv_n = 1.0 / float(Cin * H * W)
    xn_chunks = []
    for b in range(Bblk):
        a_b = acc[:, b * S:(b + 1) * S]                 # static, lane-aligned
        mean = jnp.sum(a_b * maskf) * inv_n
        d = (a_b - mean) * maskf
        var = jnp.sum(d * d) * inv_n
        scale = gamma * lax.rsqrt(var + eps)            # (Cin, 1)
        shift = beta - mean * scale
        xn_chunks.append(a_b * scale + shift)
    xn = xn_chunks[0] if Bblk == 1 else jnp.concatenate(xn_chunks, axis=1)

    # ---- pointwise1 -> exact GELU (EUP erf)
    h = jnp.dot(w1_ref[...], xn, preferred_element_type=jnp.float32) + b1
    h = 0.5 * h * (1.0 + lax.erf(h * 0.7071067811865476))

    # ---- merged pointwise2 + skip: one MXU matmul on the stacked operand
    hs = jnp.concatenate([h, res], axis=0)              # (Cmid+Cin, N)
    y = jnp.dot(w2s_ref[...], hs, preferred_element_type=jnp.float32) + b2s

    out_ref[...] = y                                    # lane-dense store


def _pick_bblk(B, target=4):
    """Largest divisor of B <= target; prefer an even grid (v7x: 2 TCs)."""
    bb = min(target, B)
    while B % bb:
        bb -= 1
    if (B // bb) % 2:
        for cand in range(bb - 1, 0, -1):
            if B % cand == 0 and (B // cand) % 2 == 0:
                return cand
    return bb


def depthwise_forward(x_nchw, params, *, kernel_size, padding, block_batch=4):
    """NCHW in / NCHW out, matching the PyTorch module."""
    B, Cin, H, W = x_nchw.shape
    K, p = kernel_size, padding
    assert 2 * p == K - 1, "skip-add requires 'same' spatial output"
    Cmid, Cout = params["w1"].shape[0], params["w2"].shape[0]
    Hp, Wp = H + 2 * p, W + 2 * p
    S = pl.cdiv(Hp * Wp, 128) * 128     # lane-dense flattened padded spatial
    Bblk = _pick_bblk(B, block_batch)
    G = B // Bblk

    # TODO(synk): for large H*W / Cin, fold the zero-padding into the kernel
    # (DMA raw NCHW rows into a zero-initialized VMEM scratch) instead of this
    # wrapper-side pad, which costs an extra HBM round-trip of the input.
    x = x_nchw.astype(jnp.float32)
    xp = jnp.pad(x, ((0, 0), (0, 0), (p, p), (p, p))).reshape(B, Cin, Hp * Wp)
    xp = jnp.pad(xp, ((0, 0), (0, 0), (0, S - Hp * Wp)))          # (B, Cin, S)
    xcs = jnp.transpose(xp, (1, 0, 2)).reshape(Cin, B * S)        # (Cin, B*S)

    # validity mask over per-sample flat coords i = y*Wp + x (y < H, x < W)
    idx = jnp.arange(S)
    mask = ((idx < H * Wp) & (idx % Wp < W)).astype(jnp.float32).reshape(1, S)

    # pack per-channel vectors into a single input (column j = param j)
    Cmax = max(Cin, Cmid, Cout)
    vecs = jnp.zeros((Cmax, 5), jnp.float32)
    vecs = vecs.at[:Cin, 0].set(params["dwb"])
    vecs = vecs.at[:Cin, 1].set(params["gamma"])
    vecs = vecs.at[:Cin, 2].set(params["beta"])
    vecs = vecs.at[:Cmid, 3].set(params["b1"])
    vecs = vecs.at[:Cout, 4].set(params["b2"] + params["bs"])

    # merged [pointwise2 | skip] weight
    w2s = jnp.concatenate([params["w2"], params["ws"]], axis=1)   # (Cout, Cmid+Cin)

    kernel = functools.partial(depthwise_block_kernel, H=H, W=W, Wp=Wp, K=K,
                               pad=p, eps=1e-5, S=S, Bblk=Bblk)

    out = pl.pallas_call(
        kernel,
        out_shape=jax.ShapeDtypeStruct((Cout, B * S), jnp.float32),
        grid_spec=pltpu.PrefetchScalarGridSpec(
            num_scalar_prefetch=0,
            grid=(G,),                                  # Bblk samples per step
            in_specs=[
                pl.BlockSpec((Cin, Bblk * S), lambda g: (0, g)),   # images
                pl.BlockSpec((1, S), lambda g: (0, 0)),            # valid mask
                pl.BlockSpec((Cin, K * K), lambda g: (0, 0)),      # dw taps
                pl.BlockSpec((Cmax, 5), lambda g: (0, 0)),         # packed vecs
                pl.BlockSpec((Cmid, Cin), lambda g: (0, 0)),       # w1
                pl.BlockSpec((Cout, Cmid + Cin), lambda g: (0, 0)),  # [w2|ws]
            ],
            out_specs=pl.BlockSpec((Cout, Bblk * S), lambda g: (0, g)),
        ),
        compiler_params=pltpu.CompilerParams(dimension_semantics=("parallel",)),
    )(xcs, mask, params["dw"], vecs, params["w1"], w2s)

    # (Cout, B*S) is channel-first flattened padded NCHW: unpack + slice valid.
    out = out.reshape(Cout, B, S).transpose(1, 0, 2)[:, :, :Hp * Wp]
    return out.reshape(B, Cout, Hp, Wp)[:, :, :H, :W]


def reference_forward(x, params, *, kernel_size, padding):
    """Pure-JAX NCHW reference (independent of the kernel path)."""
    K, p = kernel_size, padding
    B, Cin, H, W = x.shape
    x = x.astype(jnp.float32)
    dw = params["dw"].reshape(Cin, 1, K, K)                     # OIHW, groups=Cin
    y = lax.conv_general_dilated(
        x, dw, window_strides=(1, 1), padding=[(p, p), (p, p)],
        dimension_numbers=("NCHW", "OIHW", "NCHW"), feature_group_count=Cin)
    y = y + params["dwb"][None, :, None, None]
    mean = jnp.mean(y, axis=(1, 2, 3), keepdims=True)
    var = jnp.var(y, axis=(1, 2, 3), keepdims=True)
    y = (y - mean) * lax.rsqrt(var + 1e-5)
    y = y * params["gamma"][None, :, None, None] + params["beta"][None, :, None, None]
    h = jnp.einsum("oc,bchw->bohw", params["w1"], y) + params["b1"][None, :, None, None]
    h = jax.nn.gelu(h, approximate=False)
    out = jnp.einsum("oc,bchw->bohw", params["w2"], h) + params["b2"][None, :, None, None]
    out = out + jnp.einsum("oc,bchw->bohw", params["ws"], x) + params["bs"][None, :, None, None]
    return out


if __name__ == "__main__":
    # Depthwise(in_channels=4, out_channels=8, kernel_size=3, padding=1, m=2)
    B, Cin, Cout, H, W = 4, 4, 8, 16, 16
    K, pad, m = 3, 1, 2
    Cmid = Cout * m

    key = jax.random.PRNGKey(0)
    ks = jax.random.split(key, 11)
    s = 0.1
    params = {
        # depthwise Conv2d weight (Cin,1,K,K) stored as (Cin, K*K): dw[c, dy*K+dx]
        "dw":    s * jax.random.normal(ks[0], (Cin, K * K), jnp.float32),
        "dwb":   s * jax.random.normal(ks[1], (Cin,), jnp.float32),
        "gamma": 1.0 + s * jax.random.normal(ks[2], (Cin,), jnp.float32),
        "beta":  s * jax.random.normal(ks[3], (Cin,), jnp.float32),
        "w1":    s * jax.random.normal(ks[4], (Cmid, Cin), jnp.float32),
        "b1":    s * jax.random.normal(ks[5], (Cmid,), jnp.float32),
        "w2":    s * jax.random.normal(ks[6], (Cout, Cmid), jnp.float32),
        "b2":    s * jax.random.normal(ks[7], (Cout,), jnp.float32),
        # skip is a 1x1 conv since in_channels != out_channels
        "ws":    s * jax.random.normal(ks[8], (Cout, Cin), jnp.float32),
        "bs":    s * jax.random.normal(ks[9], (Cout,), jnp.float32),
    }
    x = jax.random.normal(ks[10], (B, Cin, H, W), jnp.float32)

    y = depthwise_forward(x, params, kernel_size=K, padding=pad)
    jax.block_until_ready(y)

    y_ref = reference_forward(x, params, kernel_size=K, padding=pad)
    assert y.shape == (B, Cout, H, W), y.shape
    assert jnp.allclose(y, y_ref, atol=1e-3, rtol=1e-3), "Pallas kernel mismatch vs reference"
    print("KERNEL_OK")
</pallas_src>

<mosaic_0001>
module attributes {stable_mosaic.version = 11 : i64} {
  func.func @depthwise_block_kernel(%arg0: i32, %arg1: memref<4x768xf32, #tpu.memory_space<vmem>>, %arg2: memref<1x384xf32, #tpu.memory_space<vmem>>, %arg3: memref<4x9xf32, #tpu.memory_space<vmem>>, %arg4: memref<16x5xf32, #tpu.memory_space<vmem>>, %arg5: memref<16x4xf32, #tpu.memory_space<vmem>>, %arg6: memref<8x20xf32, #tpu.memory_space<vmem>>, %arg7: memref<8x768xf32, #tpu.memory_space<vmem>>) attributes {dimension_semantics = [#tpu.dimension_semantics<parallel>], iteration_bounds = array<i64: 2>, scalar_prefetch = 0 : i64, scratch_operands = 0 : i64, tpu.core_type = #tpu.core_type<tc>, window_params = [{transform_indices = @transform_0, window_bounds = array<i64: 4, 768>}, {pipeline_mode = #tpu.pipeline_mode<synchronous>, transform_indices = @transform_1, window_bounds = array<i64: 1, 384>}, {pipeline_mode = #tpu.pipeline_mode<synchronous>, transform_indices = @transform_2, window_bounds = array<i64: 4, 9>}, {pipeline_mode = #tpu.pipeline_mode<synchronous>, transform_indices = @transform_3, window_bounds = array<i64: 16, 5>}, {pipeline_mode = #tpu.pipeline_mode<synchronous>, transform_indices = @transform_4, window_bounds = array<i64: 16, 4>}, {pipeline_mode = #tpu.pipeline_mode<synchronous>, transform_indices = @transform_5, window_bounds = array<i64: 8, 20>}, {transform_indices = @transform_6, window_bounds = array<i64: 8, 768>}]} {
    %c0 = arith.constant 0 : index
    %c0_0 = arith.constant 0 : index
    %0 = vector.load %arg1[%c0, %c0_0] : memref<4x768xf32, #tpu.memory_space<vmem>>, vector<4x768xf32>
    %c0_1 = arith.constant 0 : index
    %c0_2 = arith.constant 0 : index
    %1 = vector.load %arg3[%c0_1, %c0_2] : memref<4x9xf32, #tpu.memory_space<vmem>>, vector<4x9xf32>
    %c0_3 = arith.constant 0 : index
    %c0_4 = arith.constant 0 : index
    %2 = vector.load %arg4[%c0_3, %c0_4] : memref<16x5xf32, #tpu.memory_space<vmem>>, vector<16x5xf32>
    %c0_5 = arith.constant 0 : index
    %c0_6 = arith.constant 0 : index
    %3 = vector.load %arg2[%c0_5, %c0_6] : memref<1x384xf32, #tpu.memory_space<vmem>>, vector<1x384xf32>
    %4 = vector.extract_strided_slice %2 {offsets = [0, 0], sizes = [4, 1], strides = [1, 1]} : vector<16x5xf32> to vector<4x1xf32>
    %5 = vector.extract_strided_slice %2 {offsets = [0, 1], sizes = [4, 1], strides = [1, 1]} : vector<16x5xf32> to vector<4x1xf32>
    %6 = vector.extract_strided_slice %2 {offsets = [0, 2], sizes = [4, 1], strides = [1, 1]} : vector<16x5xf32> to vector<4x1xf32>
    %7 = vector.extract_strided_slice %2 {offsets = [0, 3], sizes = [16, 1], strides = [1, 1]} : vector<16x5xf32> to vector<16x1xf32>
    %8 = vector.extract_strided_slice %2 {offsets = [0, 4], sizes = [8, 1], strides = [1, 1]} : vector<16x5xf32> to vector<8x1xf32>
    %c767_i32 = arith.constant 767 : i32
    %9 = tpu.dynamic_rotate %0 by %c767_i32 dim 1 : vector<4x768xf32>, i32 -> vector<4x768xf32>
    %c766_i32 = arith.constant 766 : i32
    %10 = tpu.dynamic_rotate %0 by %c766_i32 dim 1 : vector<4x768xf32>, i32 -> vector<4x768xf32>
    %11 = vector.extract_strided_slice %1 {offsets = [0, 0], sizes = [4, 1], strides = [1, 1]} : vector<4x9xf32> to vector<4x1xf32>
    %12 = vector.broadcast %11 : vector<4x1xf32> to vector<4x768xf32>
    %13 = arith.mulf %0, %12 : vector<4x768xf32>
    %14 = vector.extract_strided_slice %1 {offsets = [0, 1], sizes = [4, 1], strides = [1, 1]} : vector<4x9xf32> to vector<4x1xf32>
    %15 = vector.broadcast %14 : vector<4x1xf32> to vector<4x768xf32>
    %16 = arith.mulf %9, %15 : vector<4x768xf32>
    %17 = arith.addf %13, %16 : vector<4x768xf32>
    %18 = vector.extract_strided_slice %1 {offsets = [0, 2], sizes = [4, 1], strides = [1, 1]} : vector<4x9xf32> to vector<4x1xf32>
    %19 = vector.broadcast %18 : vector<4x1xf32> to vector<4x768xf32>
    %20 = arith.mulf %10, %19 : vector<4x768xf32>
    %21 = arith.addf %17, %20 : vector<4x768xf32>
    %22 = vector.extract_strided_slice %1 {offsets = [0, 3], sizes = [4, 1], strides = [1, 1]} : vector<4x9xf32> to vector<4x1xf32>
    %23 = vector.broadcast %22 : vector<4x1xf32> to vector<4x768xf32>
    %24 = arith.mulf %0, %23 : vector<4x768xf32>
    %25 = vector.extract_strided_slice %1 {offsets = [0, 4], sizes = [4, 1], strides = [1, 1]} : vector<4x9xf32> to vector<4x1xf32>
    %26 = vector.broadcast %25 : vector<4x1xf32> to vector<4x768xf32>
    %27 = arith.mulf %9, %26 : vector<4x768xf32>
    %28 = arith.addf %24, %27 : vector<4x768xf32>
    %29 = vector.extract_strided_slice %1 {offsets = [0, 5], sizes = [4, 1], strides = [1, 1]} : vector<4x9xf32> to vector<4x1xf32>
    %30 = vector.broadcast %29 : vector<4x1xf32> to vector<4x768xf32>
    %31 = arith.mulf %10, %30 : vector<4x768xf32>
    %32 = arith.addf %28, %31 : vector<4x768xf32>
    %c750_i32 = arith.constant 750 : i32
    %33 = tpu.dynamic_rotate %32 by %c750_i32 dim 1 : vector<4x768xf32>, i32 -> vector<4x768xf32>
    %34 = arith.addf %21, %33 : vector<4x768xf32>
    %35 = vector.extract_strided_slice %1 {offsets = [0, 6], sizes = [4, 1], strides = [1, 1]} : vector<4x9xf32> to vector<4x1xf32>
    %36 = vector.broadcast %35 : vector<4x1xf32> to vector<4x768xf32>
    %37 = arith.mulf %0, %36 : vector<4x768xf32>
    %38 = vector.extract_strided_slice %1 {offsets = [0, 7], sizes = [4, 1], strides = [1, 1]} : vector<4x9xf32> to vector<4x1xf32>
    %39 = vector.broadcast %38 : vector<4x1xf32> to vector<4x768xf32>
    %40 = arith.mulf %9, %39 : vector<4x768xf32>
    %41 = arith.addf %37, %40 : vector<4x768xf32>
    %42 = vector.extract_strided_slice %1 {offsets = [0, 8], sizes = [4, 1], strides = [1, 1]} : vector<4x9xf32> to vector<4x1xf32>
    %43 = vector.broadcast %42 : vector<4x1xf32> to vector<4x768xf32>
    %44 = arith.mulf %10, %43 : vector<4x768xf32>
    %45 = arith.addf %41, %44 : vector<4x768xf32>
    %c732_i32 = arith.constant 732 : i32
    %46 = tpu.dynamic_rotate %45 by %c732_i32 dim 1 : vector<4x768xf32>, i32 -> vector<4x768xf32>
    %47 = arith.addf %34, %46 : vector<4x768xf32>
    %48 = vector.broadcast %4 : vector<4x1xf32> to vector<4x768xf32>
    %49 = arith.addf %47, %48 : vector<4x768xf32>
    %c749_i32 = arith.constant 749 : i32
    %50 = tpu.dynamic_rotate %0 by %c749_i32 dim 1 : vector<4x768xf32>, i32 -> vector<4x768xf32>
    %51 = vector.extract_strided_slice %49 {offsets = [0, 0], sizes = [4, 384], strides = [1, 1]} : vector<4x768xf32> to vector<4x384xf32>
    %52 = vector.broadcast %3 : vector<1x384xf32> to vector<4x384xf32>
    %53 = arith.mulf %51, %52 : vector<4x384xf32>
    %54 = vector.shape_cast %53 : vector<4x384xf32> to vector<1x4x384xf32>
    %cst = arith.constant dense<0.000000e+00> : vector<1xf32>
    %55 = vector.multi_reduction <add>, %54, %cst [1, 2] : vector<1x4x384xf32> to vector<1xf32>
    %56 = vector.shape_cast %55 : vector<1xf32> to vector<1x1x1xf32>
    %57 = vector.extract %56[0, 0, 0] : f32 from vector<1x1x1xf32>
    %cst_7 = arith.constant 9.765625E-4 : f32
    %58 = arith.mulf %57, %cst_7 : f32
    %59 = vector.broadcast %58 : f32 to vector<4x384xf32>
    %60 = arith.subf %51, %59 : vector<4x384xf32>
    %61 = vector.broadcast %3 : vector<1x384xf32> to vector<4x384xf32>
    %62 = arith.mulf %60, %61 : vector<4x384xf32>
    %63 = arith.mulf %62, %62 : vector<4x384xf32>
    %64 = vector.shape_cast %63 : vector<4x384xf32> to vector<1x4x384xf32>
    %cst_8 = arith.constant dense<0.000000e+00> : vector<1xf32>
    %65 = vector.multi_reduction <add>, %64, %cst_8 [1, 2] : vector<1x4x384xf32> to vector<1xf32>
    %66 = vector.shape_cast %65 : vector<1xf32> to vector<1x1x1xf32>
    %67 = vector.extract %66[0, 0, 0] : f32 from vector<1x1x1xf32>
    %cst_9 = arith.constant 9.765625E-4 : f32
    %68 = arith.mulf %67, %cst_9 : f32
    %cst_10 = arith.constant 9.99999974E-6 : f32
    %69 = arith.addf %68, %cst_10 : f32
    %70 = math.rsqrt %69 : f32
    %71 = vector.broadcast %70 : f32 to vector<4x1xf32>
    %72 = arith.mulf %5, %71 : vector<4x1xf32>
    %73 = vector.broadcast %58 : f32 to vector<4x1xf32>
    %74 = arith.mulf %73, %72 : vector<4x1xf32>
    %75 = arith.subf %6, %74 : vector<4x1xf32>
    %76 = vector.broadcast %72 : vector<4x1xf32> to vector<4x384xf32>
    %77 = arith.mulf %51, %76 : vector<4x384xf32>
    %78 = vector.broadcast %75 : vector<4x1xf32> to vector<4x384xf32>
    %79 = arith.addf %77, %78 : vector<4x384xf32>
    %80 = vector.extract_strided_slice %49 {offsets = [0, 384], sizes = [4, 384], strides = [1, 1]} : vector<4x768xf32> to vector<4x384xf32>
    %81 = vector.broadcast %3 : vector<1x384xf32> to vector<4x384xf32>
    %82 = arith.mulf %80, %81 : vector<4x384xf32>
    %83 = vector.shape_cast %82 : vector<4x384xf32> to vector<1x4x384xf32>
    %cst_11 = arith.constant dense<0.000000e+00> : vector<1xf32>
    %84 = vector.multi_reduction <add>, %83, %cst_11 [1, 2] : vector<1x4x384xf32> to vector<1xf32>
    %85 = vector.shape_cast %84 : vector<1xf32> to vector<1x1x1xf32>
    %86 = vector.extract %85[0, 0, 0] : f32 from vector<1x1x1xf32>
    %cst_12 = arith.constant 9.765625E-4 : f32
    %87 = arith.mulf %86, %cst_12 : f32
    %88 = vector.broadcast %87 : f32 to vector<4x384xf32>
    %89 = arith.subf %80, %88 : vector<4x384xf32>
    %90 = vector.broadcast %3 : vector<1x384xf32> to vector<4x384xf32>
    %91 = arith.mulf %89, %90 : vector<4x384xf32>
    %92 = arith.mulf %91, %91 : vector<4x384xf32>
    %93 = vector.shape_cast %92 : vector<4x384xf32> to vector<1x4x384xf32>
    %cst_13 = arith.constant dense<0.000000e+00> : vector<1xf32>
    %94 = vector.multi_reduction <add>, %93, %cst_13 [1, 2] : vector<1x4x384xf32> to vector<1xf32>
    %95 = vector.shape_cast %94 : vector<1xf32> to vector<1x1x1xf32>
    %96 = vector.extract %95[0, 0, 0] : f32 from vector<1x1x1xf32>
    %cst_14 = arith.constant 9.765625E-4 : f32
    %97 = arith.mulf %96, %cst_14 : f32
    %cst_15 = arith.constant 9.99999974E-6 : f32
    %98 = arith.addf %97, %cst_15 : f32
    %99 = math.rsqrt %98 : f32
    %100 = vector.broadcast %99 : f32 to vector<4x1xf32>
    %101 = arith.mulf %5, %100 : vector<4x1xf32>
    %102 = vector.broadcast %87 : f32 to vector<4x1xf32>
    %103 = arith.mulf %102, %101 : vector<4x1xf32>
    %104 = arith.subf %6, %103 : vector<4x1xf32>
    %105 = vector.broadcast %101 : vector<4x1xf32> to vector<4x384xf32>
    %106 = arith.mulf %80, %105 : vector<4x384xf32>
    %107 = vector.broadcast %104 : vector<4x1xf32> to vector<4x384xf32>
    %108 = arith.addf %106, %107 : vector<4x384xf32>
    %109 = tpu.concatenate %79, %108 in 1 : vector<4x384xf32>, vector<4x384xf32> -> vector<4x768xf32>
    %c0_16 = arith.constant 0 : index
    %c0_17 = arith.constant 0 : index
    %110 = vector.load %arg5[%c0_16, %c0_17] : memref<16x4xf32, #tpu.memory_space<vmem>>, vector<16x4xf32>
    %cst_18 = arith.constant dense<0.000000e+00> : vector<16x768xf32>
    %111 = tpu.matmul %110, %109, %cst_18 {dimension_numbers = #tpu.dot_dimension_numbers<[1], [0], [0], [1], [0, 0, 1, 1], [], []>} : vector<16x4xf32>, vector<4x768xf32>, vector<16x768xf32> -> vector<16x768xf32>
    %112 = vector.broadcast %7 : vector<16x1xf32> to vector<16x768xf32>
    %113 = arith.addf %111, %112 : vector<16x768xf32>
    %cst_19 = arith.constant 5.000000e-01 : f32
    %114 = vector.broadcast %cst_19 : f32 to vector<16x768xf32>
    %115 = arith.mulf %114, %113 : vector<16x768xf32>
    %cst_20 = arith.constant 0.707106769 : f32
    %116 = vector.broadcast %cst_20 : f32 to vector<16x768xf32>
    %117 = arith.mulf %113, %116 : vector<16x768xf32>
    %118 = math.erf %117 : vector<16x768xf32>
    %cst_21 = arith.constant 1.000000e+00 : f32
    %119 = vector.broadcast %cst_21 : f32 to vector<16x768xf32>
    %120 = arith.addf %119, %118 : vector<16x768xf32>
    %121 = arith.mulf %115, %120 : vector<16x768xf32>
    %122 = tpu.concatenate %121, %50 in 0 : vector<16x768xf32>, vector<4x768xf32> -> vector<20x768xf32>
    %c0_22 = arith.constant 0 : index
    %c0_23 = arith.constant 0 : index
    %123 = vector.load %arg6[%c0_22, %c0_23] : memref<8x20xf32, #tpu.memory_space<vmem>>, vector<8x20xf32>
    %cst_24 = arith.constant dense<0.000000e+00> : vector<8x768xf32>
    %124 = tpu.matmul %123, %122, %cst_24 {dimension_numbers = #tpu.dot_dimension_numbers<[1], [0], [0], [1], [0, 0, 1, 1], [], []>} : vector<8x20xf32>, vector<20x768xf32>, vector<8x768xf32> -> vector<8x768xf32>
    %125 = vector.broadcast %8 : vector<8x1xf32> to vector<8x768xf32>
    %126 = arith.addf %124, %125 : vector<8x768xf32>
    %c0_25 = arith.constant 0 : index
    %c0_26 = arith.constant 0 : index
    %127 = vector.load %arg7[%c0_25, %c0_26] : memref<8x768xf32, #tpu.memory_space<vmem>>, vector<8x768xf32>
    tpu.vector_store %arg7[%c0_25, %c0_26], %126 {strides = array<i32>} : memref<8x768xf32, #tpu.memory_space<vmem>>, vector<8x768xf32>,
    return
  }
  func.func @transform_0(%arg0: i32) -> (i32, i32) {
    %c0_i32 = arith.constant 0 : i32
    %c0_i32_0 = arith.constant 0 : i32
    return %c0_i32, %arg0 : i32, i32
  }
  func.func @transform_1(%arg0: i32) -> (i32, i32) {
    %c0_i32 = arith.constant 0 : i32
    %c0_i32_0 = arith.constant 0 : i32
    %c0_i32_1 = arith.constant 0 : i32
    return %c0_i32, %c0_i32_0 : i32, i32
  }
  func.func @transform_2(%arg0: i32) -> (i32, i32) {
    %c0_i32 = arith.constant 0 : i32
    %c0_i32_0 = arith.constant 0 : i32
    %c0_i32_1 = arith.constant 0 : i32
    return %c0_i32, %c0_i32_0 : i32, i32
  }
  func.func @transform_3(%arg0: i32) -> (i32, i32) {
    %c0_i32 = arith.constant 0 : i32
    %c0_i32_0 = arith.constant 0 : i32
    %c0_i32_1 = arith.constant 0 : i32
    return %c0_i32, %c0_i32_0 : i32, i32
  }
  func.func @transform_4(%arg0: i32) -> (i32, i32) {
    %c0_i32 = arith.constant 0 : i32
    %c0_i32_0 = arith.constant 0 : i32
    %c0_i32_1 = arith.constant 0 : i32
    return %c0_i32, %c0_i32_0 : i32, i32
  }
  func.func @transform_5(%arg0: i32) -> (i32, i32) {
    %c0_i32 = arith.constant 0 : i32
    %c0_i32_0 = arith.constant 0 : i32
    %c0_i32_1 = arith.constant 0 : i32
    return %c0_i32, %c0_i32_0 : i32, i32
  }
  func.func @transform_6(%arg0: i32) -> (i32, i32) {
    %c0_i32 = arith.constant 0 : i32
    %c0_i32_0 = arith.constant 0 : i32
    return %c0_i32, %arg0 : i32, i32
  }
}

</mosaic_0001>

<llo_original>
// kernel: tpu_custom_call.1
$region0: #{tpu_custom_call.1}
  #allocation0 [shape = 'u32[]', space=smem, size = 0x4, offset = 0x4, fixed_abs, tag = 'smem constant byte address 0x4 - core index']
  #allocation1 [shape = 'u32[144,128]{1,0:T(1,128)}', space=vmem, size = 0x12000, scoped, tag = 'internal scratch']
  %s0 = inlined_call_operand.hbm [shape: f32[4,1536], index: 0, kind: input, shape index: {}]
  %s1 = inlined_call_operand.vmem [shape: f32[1,384], index: 1, kind: input, shape index: {}]
  %s2 = inlined_call_operand.vmem [shape: f32[4,9], index: 2, kind: input, shape index: {}]
  %s3 = inlined_call_operand.vmem [shape: f32[16,5], index: 3, kind: input, shape index: {}]
  %s4 = inlined_call_operand.vmem [shape: f32[16,4], index: 4, kind: input, shape index: {}]
  %s5 = inlined_call_operand.vmem [shape: f32[8,20], index: 5, kind: input, shape index: {}]
  %s6 = inlined_call_operand.hbm [shape: f32[8,1536], index: 6, kind: output, shape index: {}]
  %s7 = sld [smem:[#allocation0]]
  $region61: #{tpu_custom_call.1} parent=0
    _
  %s9 = ssub.s32 1, %s7
  %s10 = scalar_select 0, %s9, %s7
  $region1: #{tpu_custom_call.1} parent=0
    #allocation2 [shape = 'u8[24576]{0}', space=vmem, size = 0x6000, scoped, tag = 'input window, operand 0']
    #allocation3 [shape = 's32[2]{0}', space=sflag, size = 0x8, scoped, tag = 'scoped memory for tpu_custom_call.1']
    #allocation4 [shape = 's32[2]{0}', space=sflag, size = 0x8, scoped, tag = 'scoped memory for tpu_custom_call.1']
    #allocation5 [shape = 'u8[49152]{0}', space=vmem, size = 0xc000, scoped, tag = 'output window, operand 0']
    %11 = vsyncpa [#allocation3], 0
    %s12 = scalar_lea.sflag [#allocation3], 1
    %13 = vsyncpa %s12, 0
    %14 = vsyncpa [#allocation4], 0
    %s15 = scalar_lea.sflag [#allocation4], 1
    %16 = vsyncpa %s15, 0
    loop: start=0, step=1, limit=4
    $region2: #{tpu_custom_call.1} parent=1 // loop_pre_header
      _
    $region3: #{tpu_custom_call.1} parent=1 // loop_header
      %s18 = sphi 0, %s22
      %p19 = scmp.ge.s32.totalorder %s18, 4
      %s28 = sphi 0, %s30
      %s31 = sphi 0, %s28
      %s32 = sphi 0, %s31
      %s48 = sphi 0, %s32
      %s52 = sphi 0, %s52
      %s54 = sphi 0, %s52
      %s55 = sphi 0, %s54
      %s69 = sphi 0, %s55
      %s73 = sphi 0, %s73
      %s75 = sphi 0, %s73
      %s76 = sphi 0, %s75
      %s90 = sphi 0, %s76
      %s94 = sphi 0, %s94
      %s96 = sphi 0, %s94
      %s97 = sphi 0, %s96
      %s111 = sphi 0, %s97
      %s115 = sphi 0, %s115
      %s117 = sphi 0, %s115
      %s118 = sphi 0, %s117
      %s132 = sphi 0, %s118
      %s136 = sphi 0, %s136
      %s138 = sphi 0, %s136
      %s139 = sphi 0, %s138
      %s153 = sphi 0, %s139
      %s159 = sphi 0, %s161
      %s162 = sphi 0, %s159
      %s163 = sphi 0, %s162
      %s179 = sphi 0, %s163
    $region4: #{tpu_custom_call.1} parent=1 // loop_header_branch
      %21 = sbr.rel (%p19) target = $region8
    $region5: #{tpu_custom_call.1} parent=1 // loop_body
      %s23 = ssub.s32 %s18, 1
      %s24 = ssub.s32 %s18, 2
      %s25 = sadd.s32 %s18, 1
      %s26 = ssub.s32 %s18, %s25
      %p27 = scmp.eq.s32.totalorder %s26, 0
      %s29 = sadd.s32 %s28, 1
      %s30 = scalar_select %p27, %s28, %s29
      %p33 = pneg %p27
      %p34 = scmp.eq.s32.totalorder %s18, 1
      %p35 = por %p33, %p34
      %p36 = scmp.ne.s32.totalorder %s28, %s31
      %p37 = scmp.eq.s32.totalorder %s18, 0
      %p38 = por %p36, %p37
      %p39 = scmp.ne.s32.totalorder %s28, %s31
      %p40 = scmp.eq.s32.totalorder %s23, 1
      %p41 = por %p39, %p40
      %p42 = scmp.ne.s32.totalorder %s31, %s32
      %p43 = scmp.eq.s32.totalorder %s23, 0
      %p44 = por %p42, %p43
      %p45 = scmp.ne.s32.totalorder %s31, %s32
      %p46 = scmp.eq.s32.totalorder %s24, 1
      %p47 = por %p45, %p46
      %p49 = scmp.ne.s32.totalorder %s32, %s48
      %p50 = scmp.eq.s32.totalorder %s24, 0
      %p51 = por %p49, %p50
      %s53 = sadd.s32 %s52, 1
      %p56 = scmp.eq.s32.totalorder %s18, 1
      %p57 = scmp.ne.s32.totalorder %s52, %s54
      %p58 = scmp.eq.s32.totalorder %s18, 0
      %p59 = por %p57, %p58
      %p60 = scmp.ne.s32.totalorder %s52, %s54
      %p61 = scmp.eq.s32.totalorder %s23, 1
      %p62 = por %p60, %p61
      %p63 = scmp.ne.s32.totalorder %s54, %s55
      %p64 = scmp.eq.s32.totalorder %s23, 0
      %p65 = por %p63, %p64
      %p66 = scmp.ne.s32.totalorder %s54, %s55
      %p67 = scmp.eq.s32.totalorder %s24, 1
      %p68 = por %p66, %p67
      %p70 = scmp.ne.s32.totalorder %s55, %s69
      %p71 = scmp.eq.s32.totalorder %s24, 0
      %p72 = por %p70, %p71
      %s74 = sadd.s32 %s73, 1
      %p77 = scmp.eq.s32.totalorder %s18, 1
      %p78 = scmp.ne.s32.totalorder %s73, %s75
      %p79 = scmp.eq.s32.totalorder %s18, 0
      %p80 = por %p78, %p79
      %p81 = scmp.ne.s32.totalorder %s73, %s75
      %p82 = scmp.eq.s32.totalorder %s23, 1
      %p83 = por %p81, %p82
      %p84 = scmp.ne.s32.totalorder %s75, %s76
      %p85 = scmp.eq.s32.totalorder %s23, 0
      %p86 = por %p84, %p85
      %p87 = scmp.ne.s32.totalorder %s75, %s76
      %p88 = scmp.eq.s32.totalorder %s24, 1
      %p89 = por %p87, %p88
      %p91 = scmp.ne.s32.totalorder %s76, %s90
      %p92 = scmp.eq.s32.totalorder %s24, 0
      %p93 = por %p91, %p92
      %s95 = sadd.s32 %s94, 1
      %p98 = scmp.eq.s32.totalorder %s18, 1
      %p99 = scmp.ne.s32.totalorder %s94, %s96
      %p100 = scmp.eq.s32.totalorder %s18, 0
      %p101 = por %p99, %p100
      %p102 = scmp.ne.s32.totalorder %s94, %s96
      %p103 = scmp.eq.s32.totalorder %s23, 1
      %p104 = por %p102, %p103
      %p105 = scmp.ne.s32.totalorder %s96, %s97
      %p106 = scmp.eq.s32.totalorder %s23, 0
      %p107 = por %p105, %p106
      %p108 = scmp.ne.s32.totalorder %s96, %s97
      %p109 = scmp.eq.s32.totalorder %s24, 1
      %p110 = por %p108, %p109
      %p112 = scmp.ne.s32.totalorder %s97, %s111
      %p113 = scmp.eq.s32.totalorder %s24, 0
      %p114 = por %p112, %p113
      %s116 = sadd.s32 %s115, 1
      %p119 = scmp.eq.s32.totalorder %s18, 1
      %p120 = scmp.ne.s32.totalorder %s115, %s117
      %p121 = scmp.eq.s32.totalorder %s18, 0
      %p122 = por %p120, %p121
      %p123 = scmp.ne.s32.totalorder %s115, %s117
      %p124 = scmp.eq.s32.totalorder %s23, 1
      %p125 = por %p123, %p124
      %p126 = scmp.ne.s32.totalorder %s117, %s118
      %p127 = scmp.eq.s32.totalorder %s23, 0
      %p128 = por %p126, %p127
      %p129 = scmp.ne.s32.totalorder %s117, %s118
      %p130 = scmp.eq.s32.totalorder %s24, 1
      %p131 = por %p129, %p130
      %p133 = scmp.ne.s32.totalorder %s118, %s132
      %p134 = scmp.eq.s32.totalorder %s24, 0
      %p135 = por %p133, %p134
      %s137 = sadd.s32 %s136, 1
      %p140 = scmp.eq.s32.totalorder %s18, 1
      %p141 = scmp.ne.s32.totalorder %s136, %s138
      %p142 = scmp.eq.s32.totalorder %s18, 0
      %p143 = por %p141, %p142
      %p144 = scmp.ne.s32.totalorder %s136, %s138
      %p145 = scmp.eq.s32.totalorder %s23, 1
      %p146 = por %p144, %p145
      %p147 = scmp.ne.s32.totalorder %s138, %s139
      %p148 = scmp.eq.s32.totalorder %s23, 0
      %p149 = por %p147, %p148
      %p150 = scmp.ne.s32.totalorder %s138, %s139
      %p151 = scmp.eq.s32.totalorder %s24, 1
      %p152 = por %p150, %p151
      %p154 = scmp.ne.s32.totalorder %s139, %s153
      %p155 = scmp.eq.s32.totalorder %s24, 0
      %p156 = por %p154, %p155
      %s157 = ssub.s32 %s18, %s25
      %p158 = scmp.eq.s32.totalorder %s157, 0
      %s160 = sadd.s32 %s159, 1
      %s161 = scalar_select %p158, %s159, %s160
      %p164 = pneg %p158
      %p165 = scmp.eq.s32.totalorder %s18, 1
      %p166 = por %p164, %p165
      %p167 = scmp.ne.s32.totalorder %s159, %s162
      %p168 = scmp.eq.s32.totalorder %s18, 0
      %p169 = por %p167, %p168
      %p170 = scmp.ne.s32.totalorder %s159, %s162
      %p171 = scmp.eq.s32.totalorder %s23, 1
      %p172 = por %p170, %p171
      %p173 = scmp.ne.s32.totalorder %s162, %s163
      %p174 = scmp.eq.s32.totalorder %s23, 0
      %p175 = por %p173, %p174
      %p176 = scmp.ne.s32.totalorder %s162, %s163
      %p177 = scmp.eq.s32.totalorder %s24, 1
      %p178 = por %p176, %p177
      %p180 = scmp.ne.s32.totalorder %s163, %s179
      %p181 = scmp.eq.s32.totalorder %s24, 0
      %p182 = por %p180, %p181
      %p183 = scmp.le.s32.totalorder 1, %s18
      %p184 = scmp.lt.s32.totalorder %s18, 3
      %p185 = pnand %p183, %p184
      %p186 = pneg %p185
      // Predicated region
      $region9: #{tpu_custom_call.1} parent=5 // pred_check
        _
      $region10: #{tpu_custom_call.1} parent=5 // pred_check_branch
        %188 = sbr.rel (%p185) target = $region12
      $region11: #{tpu_custom_call.1} parent=5 // pred_region
        %s189 = ssub.s32 %s18, 1
        // Predicated region
        $region13: #{tpu_custom_call.1} parent=11 // pred_check
          %p190 = pneg %p65
        $region14: #{tpu_custom_call.1} parent=11 // pred_check_branch
          %192 = sbr.rel (%p190) target = $region16
        $region15: #{tpu_custom_call.1} parent=11 // pred_region
          _
        $region16: #{tpu_custom_call.1} parent=11 // pred_fallthru
          _
        // Predicated region
        $region17: #{tpu_custom_call.1} parent=11 // pred_check
          %p193 = pneg %p86
        $region18: #{tpu_custom_call.1} parent=11 // pred_check_branch
          %195 = sbr.rel (%p193) target = $region20
        $region19: #{tpu_custom_call.1} parent=11 // pred_region
          _
        $region20: #{tpu_custom_call.1} parent=11 // pred_fallthru
          _
        // Predicated region
        $region21: #{tpu_custom_call.1} parent=11 // pred_check
          %p196 = pneg %p107
        $region22: #{tpu_custom_call.1} parent=11 // pred_check_branch
          %198 = sbr.rel (%p196) target = $region24
        $region23: #{tpu_custom_call.1} parent=11 // pred_region
          _
        $region24: #{tpu_custom_call.1} parent=11 // pred_fallthru
          _
        // Predicated region
        $region25: #{tpu_custom_call.1} parent=11 // pred_check
          %p199 = pneg %p128
        $region26: #{tpu_custom_call.1} parent=11 // pred_check_branch
          %201 = sbr.rel (%p199) target = $region28
        $region27: #{tpu_custom_call.1} parent=11 // pred_region
          _
        $region28: #{tpu_custom_call.1} parent=11 // pred_fallthru
          _
        // Predicated region
        $region29: #{tpu_custom_call.1} parent=11 // pred_check
          %p202 = pneg %p149
        $region30: #{tpu_custom_call.1} parent=11 // pred_check_branch
          %204 = sbr.rel (%p202) target = $region32
        $region31: #{tpu_custom_call.1} parent=11 // pred_region
          _
        $region32: #{tpu_custom_call.1} parent=11 // pred_fallthru
          _
      $region12: #{tpu_custom_call.1} parent=5 // pred_fallthru
        _
      %p205 = scmp.lt.s32.totalorder %s18, 2
      // Predicated region
      $region33: #{tpu_custom_call.1} parent=5 // pred_check
        %p206 = pneg %p205
      $region34: #{tpu_custom_call.1} parent=5 // pred_check_branch
        %208 = sbr.rel (%p206) target = $region36
      $region35: #{tpu_custom_call.1} parent=5 // pred_region
        // Predicated region
        $region37: #{tpu_custom_call.1} parent=35 // pred_check
          %p209 = pneg %p38
        $region38: #{tpu_custom_call.1} parent=35 // pred_check_branch
          %211 = sbr.rel (%p209) target = $region40
        $region39: #{tpu_custom_call.1} parent=35 // pred_region
          %s212 = sand.u32 %s28, 1
          %s213 = scalar_lea.sflag [#allocation3], %s212
          %s214 = sand.u32 %s28, 1
          %s215 = smul.addr %s214, 24
          %s216 = scalar_lea.vmem [#allocation2], %s215
          %s217 = smul.u32 6, %s18
          %s219 = ssub.s32 384, 384
          %220 = vsyncadd %s213, %s219
          %s221 = smul.addr %s217, 64
          %s222 = scalar_lea.hbm %s0, %s221
          %s224 = sshll.u32 %s216, 4
          %s225 = int_to_ptr.vmem [resolvable:$true] %s224
          %227 = dma.hbm_to_vmem [thread:$0]  %s222, 384, %s225, %s213
        $region40: #{tpu_custom_call.1} parent=35 // pred_fallthru
          _
      $region36: #{tpu_custom_call.1} parent=5 // pred_fallthru
        _
      %p228 = scmp.le.s32.totalorder 1, %s18
      %p229 = scmp.lt.s32.totalorder %s18, 3
      %p230 = pnand %p228, %p229
      %p231 = pneg %p230
      // Predicated region
      $region41: #{tpu_custom_call.1} parent=5 // pred_check
        _
      $region42: #{tpu_custom_call.1} parent=5 // pred_check_branch
        %233 = sbr.rel (%p230) target = $region44
      $region43: #{tpu_custom_call.1} parent=5 // pred_region
        %s234 = ssub.s32 %s18, 1
        %s235 = sand.u32 %s31, 1
        %s236 = scalar_lea.sflag [#allocation3], %s235
        %s237 = sand.u32 %s31, 1
        %s238 = smul.addr %s237, 24
        %s239 = scalar_lea.vmem [#allocation2], %s238
        // Predicated region
        $region45: #{tpu_custom_call.1} parent=43 // pred_check
          %p240 = pneg %p44
        $region46: #{tpu_custom_call.1} parent=43 // pred_check_branch
          %242 = sbr.rel (%p240) target = $region48
        $region47: #{tpu_custom_call.1} parent=43 // pred_region
          %243 = dma.done %s236, 384
        $region48: #{tpu_custom_call.1} parent=43 // pred_fallthru
          _
        %s244 = sand.u32 %s31, 1
        %s245 = scalar_lea.sflag [#allocation3], %s244
        %s246 = sand.u32 %s31, 1
        %s247 = smul.addr %s246, 24
        %s248 = scalar_lea.vmem [#allocation2], %s247
        %p249 = pneg %p44
        %p250 = pneg %p41
        %p251 = pneg %p65
        %p252 = pneg %p62
        %p253 = pneg %p86
        %p254 = pneg %p83
        %p255 = pneg %p107
        %p256 = pneg %p104
        %p257 = pneg %p128
        %p258 = pneg %p125
        %p259 = pneg %p149
        %p260 = pneg %p146
        %p261 = pneg %p175
        %p262 = pneg %p172
        %s263 = sand.u32 %s162, 1
        %s264 = scalar_lea.sflag [#allocation4], %s263
        %s265 = sand.u32 %s162, 1
        %s266 = smul.addr %s265, 48
        %s267 = scalar_lea.vmem [#allocation5], %s266
        %s268 = smul.u32 6, %s23
        %s269 = smul.u32 6, %s23
        %v270 = vld [vmem:[%s239] sm:$0xff]
        %v271 = vld [vmem:[%s239 + $0x8] sm:$0xff]
        %v272 = vld [vmem:[%s239 + $0x10] sm:$0xff]
        %v273 = vld [vmem:[%s2] sm:$0xf]
        %v274 = vld [vmem:[%s3] sm:$0xff]
        %v275 = vld [vmem:[%s3 + $0x8] sm:$0xff]
        %v276 = vld [vmem:[%s1] sm:$0x7]
        %v280 = vcombine.high %v270, %v270
        %v281 = vcombine.high %v271, %v271
        %v282 = vcombine.high %v272, %v272
        %286 = vrot.lane.b32.xlu0 %v270, 127
        %v287 = vpop.permute.xlu0 %286
        %288 = vrot.lane.b32.xlu0 %v280, 127
        %v289 = vpop.permute.xlu0 %288
        %290 = vrot.lane.b32.xlu0 %v271, 127
        %v291 = vpop.permute.xlu0 %290
        %292 = vrot.lane.b32.xlu0 %v281, 127
        %v293 = vpop.permute.xlu0 %292
        %294 = vrot.lane.b32.xlu0 %v272, 127
        %v295 = vpop.permute.xlu0 %294
        %296 = vrot.lane.b32.xlu0 %v282, 127
        %v297 = vpop.permute.xlu0 %296
        %v298 = vlaneseq
        %v299 = vand.u32 %v298, 127
        %vm300 = vcmp.lt.s32.totalorder %v299, 127
        %v301 = vsel %vm300, %v295, %v297
        %v302 = vsel %vm300, %v293, %v295
        %v303 = vsel %vm300, %v291, %v293
        %v304 = vsel %vm300, %v289, %v291
        %v305 = vsel %vm300, %v287, %v289
        %v306 = vsel %vm300, %v297, %v287
        %307 = vrot.lane.b32.xlu0 %v270, 126
        %v308 = vpop.permute.xlu0 %307
        %309 = vrot.lane.b32.xlu0 %v280, 126
        %v310 = vpop.permute.xlu0 %309
        %311 = vrot.lane.b32.xlu0 %v271, 126
        %v312 = vpop.permute.xlu0 %311
        %313 = vrot.lane.b32.xlu0 %v281, 126
        %v314 = vpop.permute.xlu0 %313
        %315 = vrot.lane.b32.xlu0 %v272, 126
        %v316 = vpop.permute.xlu0 %315
        %317 = vrot.lane.b32.xlu0 %v282, 126
        %v318 = vpop.permute.xlu0 %317
        %vm319 = vcmp.lt.s32.totalorder %v299, 126
        %v320 = vsel %vm319, %v316, %v318
        %v321 = vsel %vm319, %v314, %v316
        %v322 = vsel %vm319, %v312, %v314
        %v323 = vsel %vm319, %v310, %v312
        %v324 = vsel %vm319, %v308, %v310
        %v325 = vsel %vm319, %v318, %v308
        %327 = vset.pattern.permute.xlu0 0
        %328 = vperm.xlu0 %327, %v273
        %v329 = vpop.permute.xlu0 %328
        %v331 = vunpack.c.l.s4 839922192
        %v332 = vunpack.c.0.s8 %v331
        %v333 = vlaneseq
        %v334 = vshrl.u32 %v333, 7
        %v335 = vsub.s32 %v332, %v334
        %v336 = vrot.slane %v329, %v335
        %v338 = vmul.f32 %v270, %v336
        %v339 = vmul.f32 %v271, %v336
        %v340 = vmul.f32 %v272, %v336
        %341 = vset.pattern.permute.xlu0 1
        %342 = vperm.xlu0 %341, %v273
        %v343 = vpop.permute.xlu0 %342
        %v345 = vmul.f32 %v305, %v343
        %v346 = vmul.f32 %v304, %v343
        %v347 = vmul.f32 %v303, %v343
        %v348 = vmul.f32 %v302, %v343
        %v349 = vmul.f32 %v301, %v343
        %v350 = vmul.f32 %v306, %v343
        %v357 = vcombine.low %v345, %v346
        %v358 = vcombine.low %v347, %v348
        %v359 = vcombine.low %v349, %v350
        %v363 = vadd.f32 %v338, %v357
        %v364 = vadd.f32 %v339, %v358
        %v365 = vadd.f32 %v340, %v359
        %366 = vset.pattern.permute.xlu0 2
        %367 = vperm.xlu0 %366, %v273
        %v368 = vpop.permute.xlu0 %367
        %v370 = vmul.f32 %v324, %v368
        %v371 = vmul.f32 %v323, %v368
        %v372 = vmul.f32 %v322, %v368
        %v373 = vmul.f32 %v321, %v368
        %v374 = vmul.f32 %v320, %v368
        %v375 = vmul.f32 %v325, %v368
        %v382 = vcombine.low %v370, %v371
        %v383 = vcombine.low %v372, %v373
        %v384 = vcombine.low %v374, %v375
        %v388 = vadd.f32 %v363, %v382
        %v389 = vadd.f32 %v364, %v383
        %v390 = vadd.f32 %v365, %v384
        %391 = vset.pattern.permute.xlu0 3
        %392 = vperm.xlu0 %391, %v273
        %v393 = vpop.permute.xlu0 %392
        %v395 = vunpack.c.l.s4 839922192
        %v396 = vunpack.c.0.s8 %v395
        %v397 = vlaneseq
        %v398 = vshrl.u32 %v397, 7
        %v399 = vsub.s32 %v396, %v398
        %v400 = vrot.slane %v393, %v399
        %v402 = vmul.f32 %v270, %v400
        %v403 = vmul.f32 %v271, %v400
        %v404 = vmul.f32 %v272, %v400
        %405 = vset.pattern.permute.xlu0 4
        %406 = vperm.xlu0 %405, %v273
        %v407 = vpop.permute.xlu0 %406
        %v409 = vmul.f32 %v305, %v407
        %v410 = vmul.f32 %v304, %v407
        %v411 = vmul.f32 %v303, %v407
        %v412 = vmul.f32 %v302, %v407
        %v413 = vmul.f32 %v301, %v407
        %v414 = vmul.f32 %v306, %v407
        %v421 = vcombine.low %v409, %v410
        %v422 = vcombine.low %v411, %v412
        %v423 = vcombine.low %v413, %v414
        %v427 = vadd.f32 %v402, %v421
        %v428 = vadd.f32 %v403, %v422
        %v429 = vadd.f32 %v404, %v423
        %430 = vset.pattern.permute.xlu0 5
        %431 = vperm.xlu0 %430, %v273
        %v432 = vpop.permute.xlu0 %431
        %v434 = vmul.f32 %v324, %v432
        %v435 = vmul.f32 %v323, %v432
        %v436 = vmul.f32 %v322, %v432
        %v437 = vmul.f32 %v321, %v432
        %v438 = vmul.f32 %v320, %v432
        %v439 = vmul.f32 %v325, %v432
        %v446 = vcombine.low %v434, %v435
        %v447 = vcombine.low %v436, %v437
        %v448 = vcombine.low %v438, %v439
        %v452 = vadd.f32 %v427, %v446
        %v453 = vadd.f32 %v428, %v447
        %v454 = vadd.f32 %v429, %v448
        %v458 = vcombine.high %v452, %v452
        %v459 = vcombine.high %v453, %v453
        %v460 = vcombine.high %v454, %v454
        %464 = vrot.lane.b32.xlu0 %v452, 110
        %v465 = vpop.permute.xlu0 %464
        %466 = vrot.lane.b32.xlu0 %v458, 110
        %v467 = vpop.permute.xlu0 %466
        %468 = vrot.lane.b32.xlu0 %v453, 110
        %v469 = vpop.permute.xlu0 %468
        %470 = vrot.lane.b32.xlu0 %v459, 110
        %v471 = vpop.permute.xlu0 %470
        %472 = vrot.lane.b32.xlu0 %v454, 110
        %v473 = vpop.permute.xlu0 %472
        %474 = vrot.lane.b32.xlu0 %v460, 110
        %v475 = vpop.permute.xlu0 %474
        %vm476 = vcmp.lt.s32.totalorder %v299, 110
        %v477 = vsel %vm476, %v473, %v475
        %v478 = vsel %vm476, %v471, %v473
        %v479 = vsel %vm476, %v469, %v471
        %v480 = vsel %vm476, %v467, %v469
        %v481 = vsel %vm476, %v465, %v467
        %v482 = vsel %vm476, %v475, %v465
        %v489 = vcombine.low %v481, %v480
        %v490 = vcombine.low %v479, %v478
        %v491 = vcombine.low %v477, %v482
        %v495 = vadd.f32 %v388, %v489
        %v496 = vadd.f32 %v389, %v490
        %v497 = vadd.f32 %v390, %v491
        %498 = vset.pattern.permute.xlu0 6
        %499 = vperm.xlu0 %498, %v273
        %v500 = vpop.permute.xlu0 %499
        %v502 = vunpack.c.l.s4 839922192
        %v503 = vunpack.c.0.s8 %v502
        %v504 = vlaneseq
        %v505 = vshrl.u32 %v504, 7
        %v506 = vsub.s32 %v503, %v505
        %v507 = vrot.slane %v500, %v506
        %v509 = vmul.f32 %v270, %v507
        %v510 = vmul.f32 %v271, %v507
        %v511 = vmul.f32 %v272, %v507
        %512 = vset.pattern.permute.xlu0 7
        %513 = vperm.xlu0 %512, %v273
        %v514 = vpop.permute.xlu0 %513
        %v516 = vmul.f32 %v305, %v514
        %v517 = vmul.f32 %v304, %v514
        %v518 = vmul.f32 %v303, %v514
        %v519 = vmul.f32 %v302, %v514
        %v520 = vmul.f32 %v301, %v514
        %v521 = vmul.f32 %v306, %v514
        %v528 = vcombine.low %v516, %v517
        %v529 = vcombine.low %v518, %v519
        %v530 = vcombine.low %v520, %v521
        %v534 = vadd.f32 %v509, %v528
        %v535 = vadd.f32 %v510, %v529
        %v536 = vadd.f32 %v511, %v530
        %537 = vset.pattern.permute.xlu0 8
        %538 = vperm.xlu0 %537, %v273
        %v539 = vpop.permute.xlu0 %538
        %v541 = vmul.f32 %v324, %v539
        %v542 = vmul.f32 %v323, %v539
        %v543 = vmul.f32 %v322, %v539
        %v544 = vmul.f32 %v321, %v539
        %v545 = vmul.f32 %v320, %v539
        %v546 = vmul.f32 %v325, %v539
        %v553 = vcombine.low %v541, %v542
        %v554 = vcombine.low %v543, %v544
        %v555 = vcombine.low %v545, %v546
        %v559 = vadd.f32 %v534, %v553
        %v560 = vadd.f32 %v535, %v554
        %v561 = vadd.f32 %v536, %v555
        %v565 = vcombine.high %v559, %v559
        %v566 = vcombine.high %v560, %v560
        %v567 = vcombine.high %v561, %v561
        %571 = vrot.lane.b32.xlu0 %v559, 92
        %v572 = vpop.permute.xlu0 %571
        %573 = vrot.lane.b32.xlu0 %v565, 92
        %v574 = vpop.permute.xlu0 %573
        %575 = vrot.lane.b32.xlu0 %v560, 92
        %v576 = vpop.permute.xlu0 %575
        %577 = vrot.lane.b32.xlu0 %v566, 92
        %v578 = vpop.permute.xlu0 %577
        %579 = vrot.lane.b32.xlu0 %v561, 92
        %v580 = vpop.permute.xlu0 %579
        %581 = vrot.lane.b32.xlu0 %v567, 92
        %v582 = vpop.permute.xlu0 %581
        %vm583 = vcmp.lt.s32.totalorder %v299, 92
        %v584 = vsel %vm583, %v580, %v582
        %v585 = vsel %vm583, %v578, %v580
        %v586 = vsel %vm583, %v576, %v578
        %v587 = vsel %vm583, %v574, %v576
        %v588 = vsel %vm583, %v572, %v574
        %v589 = vsel %vm583, %v582, %v572
        %v596 = vcombine.low %v588, %v587
        %v597 = vcombine.low %v586, %v585
        %v598 = vcombine.low %v584, %v589
        %v602 = vadd.f32 %v495, %v596
        %v603 = vadd.f32 %v496, %v597
        %v604 = vadd.f32 %v497, %v598
        %606 = vset.pattern.permute.xlu0 0
        %607 = vperm.xlu0 %606, %v274
        %v608 = vpop.permute.xlu0 %607
        %v610 = vunpack.c.l.s4 839922192
        %v611 = vunpack.c.0.s8 %v610
        %v612 = vlaneseq
        %v613 = vshrl.u32 %v612, 7
        %v614 = vsub.s32 %v611, %v613
        %v615 = vrot.slane %v608, %v614
        %v617 = vadd.f32 %v602, %v615
        %v618 = vadd.f32 %v603, %v615
        %v619 = vadd.f32 %v604, %v615
        %620 = vrot.lane.b32.xlu0 %v270, 109
        %v621 = vpop.permute.xlu0 %620
        %622 = vrot.lane.b32.xlu0 %v280, 109
        %v623 = vpop.permute.xlu0 %622
        %624 = vrot.lane.b32.xlu0 %v271, 109
        %v625 = vpop.permute.xlu0 %624
        %626 = vrot.lane.b32.xlu0 %v281, 109
        %v627 = vpop.permute.xlu0 %626
        %628 = vrot.lane.b32.xlu0 %v272, 109
        %v629 = vpop.permute.xlu0 %628
        %630 = vrot.lane.b32.xlu0 %v282, 109
        %v631 = vpop.permute.xlu0 %630
        %vm632 = vcmp.lt.s32.totalorder %v299, 109
        %v633 = vsel %vm632, %v629, %v631
        %v634 = vsel %vm632, %v627, %v629
        %v635 = vsel %vm632, %v625, %v627
        %v636 = vsel %vm632, %v623, %v625
        %v637 = vsel %vm632, %v621, %v623
        %v638 = vsel %vm632, %v631, %v621
        %v640 = vlaneseq
        %v641 = vshrl.u32 %v640, 7
        %v642 = vsub.s32 0, %v641
        %v643 = vrot.slane %v276, %v642
        %v644 = vlaneseq
        %v645 = vshrl.u32 %v644, 7
        %v646 = vsub.s32 1, %v645
        %v647 = vrot.slane %v276, %v646
        %v648 = vlaneseq
        %v649 = vshrl.u32 %v648, 7
        %v650 = vsub.s32 2, %v649
        %v651 = vrot.slane %v276, %v650
        %v653 = vcombine.low %v643, %v647
        %v655 = vmul.f32 %v617, %v653
        %v656 = vmul.f32 %v618, %v651
        %v658 = vcombine.high %v655, %v655
        %vm660 = vcmask 1043456
        %v661 = vsel %vm660, %v655, 0.0
        %v662 = vsel %vm660, %v658, 0.0
        %v663 = vadd.f32 %v661, %v662
        %v664 = vsel %vm660, %v656, 0.0
        %v665 = vadd.f32 %v663, %v664
        %666 = vadd.xlane.f32.xlu0 %v665
        %v667 = vpop.xlane.xlu0 %666
        %v668 = vrot.slane %v667, 4
        %v669 = vadd.f32 %v667, %v668
        %v670 = vrot.slane %v669, 2
        %v671 = vadd.f32 %v669, %v670
        %v672 = vrot.slane %v671, 1
        %v673 = vadd.f32 %v671, %v672
        %s674 = vtos %v673
        %s675 = smul.f32 %s674, 0.0009765625
        %v676 = vstv %s675
        %v677 = vsub.f32 %v617, %v676
        %v678 = vsub.f32 %v618, %v676
        %v679 = vmul.f32 %v677, %v653
        %v680 = vmul.f32 %v678, %v651
        %v681 = vmul.f32 %v679, %v679
        %v682 = vmul.f32 %v680, %v680
        %v684 = vcombine.high %v681, %v681
        %v686 = vsel %vm660, %v681, 0.0
        %v687 = vsel %vm660, %v684, 0.0
        %v688 = vadd.f32 %v686, %v687
        %v689 = vsel %vm660, %v682, 0.0
        %v690 = vadd.f32 %v688, %v689
        %691 = vadd.xlane.f32.xlu0 %v690
        %v692 = vpop.xlane.xlu0 %691
        %v693 = vrot.slane %v692, 4
        %v694 = vadd.f32 %v692, %v693
        %v695 = vrot.slane %v694, 2
        %v696 = vadd.f32 %v694, %v695
        %v697 = vrot.slane %v696, 1
        %v698 = vadd.f32 %v696, %v697
        %s699 = vtos %v698
        %s700 = smul.f32 %s699, 0.0009765625
        %s701 = sadd.f32 %s700, 1e-05
        %v702 = vstv %s701
        %v703 = vrsqrt.pop %v702
        %s704 = vtos %v703
        %v705 = vstv %s704
        %v706 = vmul.f32 %v274, %v705
        %v707 = vmul.f32 %v676, %v706
        %709 = vrot.lane.b32.xlu0 %v707, 1
        %v710 = vpop.permute.xlu0 %709
        %v712 = vsub.f32 %v274, %v710
        %714 = vset.pattern.permute.xlu0 1
        %715 = vperm.xlu0 %714, %v706
        %v716 = vpop.permute.xlu0 %715
        %v718 = vunpack.c.l.s4 839922192
        %v719 = vunpack.c.0.s8 %v718
        %v720 = vlaneseq
        %v721 = vshrl.u32 %v720, 7
        %v722 = vsub.s32 %v719, %v721
        %v723 = vrot.slane %v716, %v722
        %v725 = vmul.f32 %v617, %v723
        %v726 = vmul.f32 %v618, %v723
        %728 = vset.pattern.permute.xlu0 2
        %729 = vperm.xlu0 %728, %v712
        %v730 = vpop.permute.xlu0 %729
        %v732 = vunpack.c.l.s4 839922192
        %v733 = vunpack.c.0.s8 %v732
        %v734 = vlaneseq
        %v735 = vshrl.u32 %v734, 7
        %v736 = vsub.s32 %v733, %v735
        %v737 = vrot.slane %v730, %v736
        %v739 = vadd.f32 %v725, %v737
        %v740 = vadd.f32 %v726, %v737
        %v743 = vrot.slane %v618, 4
        %v744 = vrot.slane %v619, 4
        %v745 = vsel %vm660, %v743, %v744
        %v748 = vmul.f32 %v745, %v653
        %v749 = vmul.f32 %v744, %v651
        %v751 = vcombine.high %v748, %v748
        %v753 = vsel %vm660, %v748, 0.0
        %v754 = vsel %vm660, %v751, 0.0
        %v755 = vadd.f32 %v753, %v754
        %v756 = vsel %vm660, %v749, 0.0
        %v757 = vadd.f32 %v755, %v756
        %758 = vadd.xlane.f32.xlu0 %v757
        %v759 = vpop.xlane.xlu0 %758
        %v760 = vrot.slane %v759, 4
        %v761 = vadd.f32 %v759, %v760
        %v762 = vrot.slane %v761, 2
        %v763 = vadd.f32 %v761, %v762
        %v764 = vrot.slane %v763, 1
        %v765 = vadd.f32 %v763, %v764
        %s766 = vtos %v765
        %s767 = smul.f32 %s766, 0.0009765625
        %v768 = vstv %s767
        %v769 = vsub.f32 %v745, %v768
        %v770 = vsub.f32 %v744, %v768
        %v771 = vmul.f32 %v769, %v653
        %v772 = vmul.f32 %v770, %v651
        %v773 = vmul.f32 %v771, %v771
        %v774 = vmul.f32 %v772, %v772
        %v776 = vcombine.high %v773, %v773
        %v778 = vsel %vm660, %v773, 0.0
        %v779 = vsel %vm660, %v776, 0.0
        %v780 = vadd.f32 %v778, %v779
        %v781 = vsel %vm660, %v774, 0.0
        %v782 = vadd.f32 %v780, %v781
        %783 = vadd.xlane.f32.xlu0 %v782
        %v784 = vpop.xlane.xlu0 %783
        %v785 = vrot.slane %v784, 4
        %v786 = vadd.f32 %v784, %v785
        %v787 = vrot.slane %v786, 2
        %v788 = vadd.f32 %v786, %v787
        %v789 = vrot.slane %v788, 1
        %v790 = vadd.f32 %v788, %v789
        %s791 = vtos %v790
        %s792 = smul.f32 %s791, 0.0009765625
        %s793 = sadd.f32 %s792, 1e-05
        %v794 = vstv %s793
        %v795 = vrsqrt.pop %v794
        %s796 = vtos %v795
        %v797 = vstv %s796
        %v798 = vmul.f32 %v274, %v797
        %v799 = vmul.f32 %v768, %v798
        %801 = vrot.lane.b32.xlu0 %v799, 1
        %v802 = vpop.permute.xlu0 %801
        %v804 = vsub.f32 %v274, %v802
        %806 = vset.pattern.permute.xlu0 1
        %807 = vperm.xlu0 %806, %v798
        %v808 = vpop.permute.xlu0 %807
        %v810 = vunpack.c.l.s4 839922192
        %v811 = vunpack.c.0.s8 %v810
        %v812 = vlaneseq
        %v813 = vshrl.u32 %v812, 7
        %v814 = vsub.s32 %v811, %v813
        %v815 = vrot.slane %v808, %v814
        %v817 = vmul.f32 %v745, %v815
        %v818 = vmul.f32 %v744, %v815
        %820 = vset.pattern.permute.xlu0 2
        %821 = vperm.xlu0 %820, %v804
        %v822 = vpop.permute.xlu0 %821
        %v824 = vunpack.c.l.s4 839922192
        %v825 = vunpack.c.0.s8 %v824
        %v826 = vlaneseq
        %v827 = vshrl.u32 %v826, 7
        %v828 = vsub.s32 %v825, %v827
        %v829 = vrot.slane %v822, %v828
        %v831 = vadd.f32 %v817, %v829
        %v832 = vadd.f32 %v818, %v829
        %v835 = vcombine.high %v739, %v739
        %v838 = vcombine.high %v831, %v831
        %v839 = vld [vmem:[%s4] sm:$0xff]
        %v840 = vld [vmem:[%s4 + $0x8] sm:$0xff]
        %841 = vset.pattern.permute.xlu0 3
        %842 = vperm.xlu0 %841, %v274
        %v843 = vpop.permute.xlu0 %842
        %846 = vset.pattern.permute.xlu0 3
        %847 = vperm.xlu0 %846, %v275
        %v848 = vpop.permute.xlu0 %847
        %vm850 = vcmask 31744
        %v852 = vsel %vm850, %v839, 0
        %v855 = vsel %vm850, %v840, 0
        %v857 = vsel %vm660, %v739, 0
        %v859 = vsel %vm660, %v835, 0
        %v861 = vsel %vm660, %v740, 0
        %v863 = vsel %vm660, %v831, 0
        %v865 = vsel %vm660, %v838, 0
        %v867 = vsel %vm660, %v832, 0
        %869 = vmatprep.subr.mxu0 %v859
        %870 = vmatpush1.msra.mxu0 %v857
        %871 = vmatprep.subr.mxu0 0.0
        %872 = vmatpush1.msra.mxu0 0.0
        %873 = vmatprep.subr.mxu0 0.0
        %874 = vmatpush1.msra.mxu0 0.0
        %875 = vmatprep.subr.mxu0 0.0
        %876 = vmatpush1.msra.mxu0 0.0
        %877 = vmatprep.subr.mxu0 0.0
        %878 = vmatpush1.msra.mxu0 0.0
        %879 = vmatprep.subr.mxu0 0.0
        %880 = vmatpush1.msra.mxu0 0.0
        %881 = vmatprep.subr.mxu0 0.0
        %882 = vmatpush1.msra.mxu0 0.0
        %883 = vmatprep.subr.mxu0 0.0
        %884 = vmatpush1.msra.mxu0 0.0
        %885 = vmatprep.subr.mxu0 0.0
        %886 = vmatpush1.msra.mxu0 0.0
        %887 = vmatprep.subr.mxu0 0.0
        %888 = vmatpush1.msra.mxu0 0.0
        %889 = vmatprep.subr.mxu0 0.0
        %890 = vmatpush1.msra.mxu0 0.0
        %891 = vmatprep.subr.mxu0 0.0
        %892 = vmatpush1.msra.mxu0 0.0
        %893 = vmatprep.subr.mxu0 0.0
        %894 = vmatpush1.msra.mxu0 0.0
        %895 = vmatprep.subr.mxu0 0.0
        %896 = vmatpush1.msra.mxu0 0.0
        %897 = vmatprep.subr.mxu0 0.0
        %898 = vmatpush1.msra.mxu0 0.0
        %899 = vmatprep.subr.mxu0 0.0
        %900 = vmatpush1.msra.mxu0 0.0
        %901 = vmatprep.subr.mxu0 0.0
        %902 = vmatpush1.msra.mxu0 0.0
        %903 = vmatprep.subr.mxu0 0.0
        %904 = vmatpush1.msra.mxu0 0.0
        %905 = vmatprep.subr.mxu0 0.0
        %906 = vmatpush1.msra.mxu0 0.0
        %907 = vmatprep.subr.mxu0 0.0
        %908 = vmatpush1.msra.mxu0 0.0
        %909 = vmatprep.subr.mxu0 0.0
        %910 = vmatpush1.msra.mxu0 0.0
        %911 = vmatprep.subr.mxu0 0.0
        %912 = vmatpush1.msra.mxu0 0.0
        %913 = vmatprep.subr.mxu0 0.0
        %914 = vmatpush1.msra.mxu0 0.0
        %915 = vmatprep.subr.mxu0 0.0
        %916 = vmatpush1.msra.mxu0 0.0
        %917 = vmatprep.subr.mxu0 0.0
        %918 = vmatpush1.msra.mxu0 0.0
        %919 = vmatprep.subr.mxu0 0.0
        %920 = vmatpush1.msra.mxu0 0.0
        %921 = vmatprep.subr.mxu0 0.0
        %922 = vmatpush1.msra.mxu0 0.0
        %923 = vmatprep.subr.mxu0 0.0
        %924 = vmatpush1.msra.mxu0 0.0
        %925 = vmatprep.subr.mxu0 0.0
        %926 = vmatpush1.msra.mxu0 0.0
        %927 = vmatprep.subr.mxu0 0.0
        %928 = vmatpush1.msra.mxu0 0.0
        %929 = vmatprep.subr.mxu0 0.0
        %930 = vmatpush1.msra.mxu0 0.0
        %931 = vmatprep.subr.mxu0 0.0
        %932 = vmatpush1.msra.mxu0 0.0
        %933 = vmatprep.mubr.f32.mxu0 0.0
        %934 = vmatmul.mubr.f32.gmra.mrb[0].mxu0 %v852
        %v935 = vpop.f32.mrb[0].mxu0
        %v936 = vadd.f32 %v843, %v935
        %v937 = vpop.f32.mrb[0].mxu0
        %v938 = vadd.f32 %v843, %v937
        %939 = vmatprep.mubr.f32.mxu0 0.0
        %940 = vmatmul.mubr.f32.gmra.mrb[0].mxu0 %v855
        %v941 = vpop.f32.mrb[0].mxu0
        %v942 = vadd.f32 %v848, %v941
        %v943 = vpop.f32.mrb[0].mxu0
        %v944 = vadd.f32 %v848, %v943
        %945 = vdwg.mxu0
        %946 = vmatprep.subr.mxu0 %v863
        %947 = vmatpush1.msra.mxu0 %v861
        %948 = vmatprep.subr.mxu0 0.0
        %949 = vmatpush1.msra.mxu0 0.0
        %950 = vmatprep.subr.mxu0 0.0
        %951 = vmatpush1.msra.mxu0 0.0
        %952 = vmatprep.subr.mxu0 0.0
        %953 = vmatpush1.msra.mxu0 0.0
        %954 = vmatprep.subr.mxu0 0.0
        %955 = vmatpush1.msra.mxu0 0.0
        %956 = vmatprep.subr.mxu0 0.0
        %957 = vmatpush1.msra.mxu0 0.0
        %958 = vmatprep.subr.mxu0 0.0
        %959 = vmatpush1.msra.mxu0 0.0
        %960 = vmatprep.subr.mxu0 0.0
        %961 = vmatpush1.msra.mxu0 0.0
        %962 = vmatprep.subr.mxu0 0.0
        %963 = vmatpush1.msra.mxu0 0.0
        %964 = vmatprep.subr.mxu0 0.0
        %965 = vmatpush1.msra.mxu0 0.0
        %966 = vmatprep.subr.mxu0 0.0
        %967 = vmatpush1.msra.mxu0 0.0
        %968 = vmatprep.subr.mxu0 0.0
        %969 = vmatpush1.msra.mxu0 0.0
        %970 = vmatprep.subr.mxu0 0.0
        %971 = vmatpush1.msra.mxu0 0.0
        %972 = vmatprep.subr.mxu0 0.0
        %973 = vmatpush1.msra.mxu0 0.0
        %974 = vmatprep.subr.mxu0 0.0
        %975 = vmatpush1.msra.mxu0 0.0
        %976 = vmatprep.subr.mxu0 0.0
        %977 = vmatpush1.msra.mxu0 0.0
        %978 = vmatprep.subr.mxu0 0.0
        %979 = vmatpush1.msra.mxu0 0.0
        %980 = vmatprep.subr.mxu0 0.0
        %981 = vmatpush1.msra.mxu0 0.0
        %982 = vmatprep.subr.mxu0 0.0
        %983 = vmatpush1.msra.mxu0 0.0
        %984 = vmatprep.subr.mxu0 0.0
        %985 = vmatpush1.msra.mxu0 0.0
        %986 = vmatprep.subr.mxu0 0.0
        %987 = vmatpush1.msra.mxu0 0.0
        %988 = vmatprep.subr.mxu0 0.0
        %989 = vmatpush1.msra.mxu0 0.0
        %990 = vmatprep.subr.mxu0 0.0
        %991 = vmatpush1.msra.mxu0 0.0
        %992 = vmatprep.subr.mxu0 0.0
        %993 = vmatpush1.msra.mxu0 0.0
        %994 = vmatprep.subr.mxu0 0.0
        %995 = vmatpush1.msra.mxu0 0.0
        %996 = vmatprep.subr.mxu0 0.0
        %997 = vmatpush1.msra.mxu0 0.0
        %998 = vmatprep.subr.mxu0 0.0
        %999 = vmatpush1.msra.mxu0 0.0
        %1000 = vmatprep.subr.mxu0 0.0
        %1001 = vmatpush1.msra.mxu0 0.0
        %1002 = vmatprep.subr.mxu0 0.0
        %1003 = vmatpush1.msra.mxu0 0.0
        %1004 = vmatprep.subr.mxu0 0.0
        %1005 = vmatpush1.msra.mxu0 0.0
        %1006 = vmatprep.subr.mxu0 0.0
        %1007 = vmatpush1.msra.mxu0 0.0
        %1008 = vmatprep.subr.mxu0 0.0
        %1009 = vmatpush1.msra.mxu0 0.0
        %1010 = vmatprep.mubr.f32.mxu0 0.0
        %1011 = vmatmul.mubr.f32.gmra.mrb[0].mxu0 %v852
        %v1012 = vpop.f32.mrb[0].mxu0
        %v1013 = vadd.f32 %v843, %v1012
        %v1014 = vpop.f32.mrb[0].mxu0
        %v1015 = vadd.f32 %v843, %v1014
        %1016 = vmatprep.mubr.f32.mxu0 0.0
        %1017 = vmatmul.mubr.f32.gmra.mrb[0].mxu0 %v855
        %v1018 = vpop.f32.mrb[0].mxu0
        %v1019 = vadd.f32 %v848, %v1018
        %v1020 = vpop.f32.mrb[0].mxu0
        %v1021 = vadd.f32 %v848, %v1020
        %1022 = vdwg.mxu0
        %1023 = vmatprep.subr.mxu0 %v867
        %1024 = vmatpush1.msra.mxu0 %v865
        %1025 = vmatprep.subr.mxu0 0.0
        %1026 = vmatpush1.msra.mxu0 0.0
        %1027 = vmatprep.subr.mxu0 0.0
        %1028 = vmatpush1.msra.mxu0 0.0
        %1029 = vmatprep.subr.mxu0 0.0
        %1030 = vmatpush1.msra.mxu0 0.0
        %1031 = vmatprep.subr.mxu0 0.0
        %1032 = vmatpush1.msra.mxu0 0.0
        %1033 = vmatprep.subr.mxu0 0.0
        %1034 = vmatpush1.msra.mxu0 0.0
        %1035 = vmatprep.subr.mxu0 0.0
        %1036 = vmatpush1.msra.mxu0 0.0
        %1037 = vmatprep.subr.mxu0 0.0
        %1038 = vmatpush1.msra.mxu0 0.0
        %1039 = vmatprep.subr.mxu0 0.0
        %1040 = vmatpush1.msra.mxu0 0.0
        %1041 = vmatprep.subr.mxu0 0.0
        %1042 = vmatpush1.msra.mxu0 0.0
        %1043 = vmatprep.subr.mxu0 0.0
        %1044 = vmatpush1.msra.mxu0 0.0
        %1045 = vmatprep.subr.mxu0 0.0
        %1046 = vmatpush1.msra.mxu0 0.0
        %1047 = vmatprep.subr.mxu0 0.0
        %1048 = vmatpush1.msra.mxu0 0.0
        %1049 = vmatprep.subr.mxu0 0.0
        %1050 = vmatpush1.msra.mxu0 0.0
        %1051 = vmatprep.subr.mxu0 0.0
        %1052 = vmatpush1.msra.mxu0 0.0
        %1053 = vmatprep.subr.mxu0 0.0
        %1054 = vmatpush1.msra.mxu0 0.0
        %1055 = vmatprep.subr.mxu0 0.0
        %1056 = vmatpush1.msra.mxu0 0.0
        %1057 = vmatprep.subr.mxu0 0.0
        %1058 = vmatpush1.msra.mxu0 0.0
        %1059 = vmatprep.subr.mxu0 0.0
        %1060 = vmatpush1.msra.mxu0 0.0
        %1061 = vmatprep.subr.mxu0 0.0
        %1062 = vmatpush1.msra.mxu0 0.0
        %1063 = vmatprep.subr.mxu0 0.0
        %1064 = vmatpush1.msra.mxu0 0.0
        %1065 = vmatprep.subr.mxu0 0.0
        %1066 = vmatpush1.msra.mxu0 0.0
        %1067 = vmatprep.subr.mxu0 0.0
        %1068 = vmatpush1.msra.mxu0 0.0
        %1069 = vmatprep.subr.mxu0 0.0
        %1070 = vmatpush1.msra.mxu0 0.0
        %1071 = vmatprep.subr.mxu0 0.0
        %1072 = vmatpush1.msra.mxu0 0.0
        %1073 = vmatprep.subr.mxu0 0.0
        %1074 = vmatpush1.msra.mxu0 0.0
        %1075 = vmatprep.subr.mxu0 0.0
        %1076 = vmatpush1.msra.mxu0 0.0
        %1077 = vmatprep.subr.mxu0 0.0
        %1078 = vmatpush1.msra.mxu0 0.0
        %1079 = vmatprep.subr.mxu0 0.0
        %1080 = vmatpush1.msra.mxu0 0.0
        %1081 = vmatprep.subr.mxu0 0.0
        %1082 = vmatpush1.msra.mxu0 0.0
        %1083 = vmatprep.subr.mxu0 0.0
        %1084 = vmatpush1.msra.mxu0 0.0
        %1085 = vmatprep.subr.mxu0 0.0
        %1086 = vmatpush1.msra.mxu0 0.0
        %1087 = vmatprep.mubr.f32.mxu0 0.0
        %1088 = vmatmul.mubr.f32.gmra.mrb[0].mxu0 %v852
        %v1089 = vpop.f32.mrb[0].mxu0
        %v1090 = vadd.f32 %v843, %v1089
        %v1091 = vpop.f32.mrb[0].mxu0
        %v1092 = vadd.f32 %v843, %v1091
        %1093 = vmatprep.mubr.f32.mxu0 0.0
        %1094 = vmatmul.mubr.f32.gmra.mrb[0].mxu0 %v855
        %v1095 = vpop.f32.mrb[0].mxu0
        %v1096 = vadd.f32 %v848, %v1095
        %v1097 = vpop.f32.mrb[0].mxu0
        %v1098 = vadd.f32 %v848, %v1097
        %1099 = vdwg.mxu0
        %v1100 = vmul.f32 %v936, 0.5
        %v1101 = vmul.f32 %v938, 0.5
        %v1102 = vmul.f32 %v1013, 0.5
        %v1103 = vmul.f32 %v1015, 0.5
        %v1104 = vmul.f32 %v1090, 0.5
        %v1105 = vmul.f32 %v1092, 0.5
        %v1106 = vmul.f32 %v942, 0.5
        %v1107 = vmul.f32 %v944, 0.5
        %v1108 = vmul.f32 %v1019, 0.5
        %v1109 = vmul.f32 %v1021, 0.5
        %v1110 = vmul.f32 %v1096, 0.5
        %v1111 = vmul.f32 %v1098, 0.5
        %v1112 = vmul.f32 %v936, 0.70710677
        %v1113 = vmul.f32 %v938, 0.70710677
        %v1114 = vmul.f32 %v1013, 0.70710677
        %v1115 = vmul.f32 %v1015, 0.70710677
        %v1116 = vmul.f32 %v1090, 0.70710677
        %v1117 = vmul.f32 %v1092, 0.70710677
        %v1118 = vmul.f32 %v942, 0.70710677
        %v1119 = vmul.f32 %v944, 0.70710677
        %v1120 = vmul.f32 %v1019, 0.70710677
        %v1121 = vmul.f32 %v1021, 0.70710677
        %v1122 = vmul.f32 %v1096, 0.70710677
        %v1123 = vmul.f32 %v1098, 0.70710677
        %v1124 = verf.f32.pop %v1112
        %v1125 = verf.f32.pop %v1113
        %v1126 = verf.f32.pop %v1114
        %v1127 = verf.f32.pop %v1115
        %v1128 = verf.f32.pop %v1116
        %v1129 = verf.f32.pop %v1117
        %v1130 = verf.f32.pop %v1118
        %v1131 = verf.f32.pop %v1119
        %v1132 = verf.f32.pop %v1120
        %v1133 = verf.f32.pop %v1121
        %v1134 = verf.f32.pop %v1122
        %v1135 = verf.f32.pop %v1123
        %v1136 = vadd.f32 %v1124, 1.0
        %v1137 = vadd.f32 %v1125, 1.0
        %v1138 = vadd.f32 %v1126, 1.0
        %v1139 = vadd.f32 %v1127, 1.0
        %v1140 = vadd.f32 %v1128, 1.0
        %v1141 = vadd.f32 %v1129, 1.0
        %v1142 = vadd.f32 %v1130, 1.0
        %v1143 = vadd.f32 %v1131, 1.0
        %v1144 = vadd.f32 %v1132, 1.0
        %v1145 = vadd.f32 %v1133, 1.0
        %v1146 = vadd.f32 %v1134, 1.0
        %v1147 = vadd.f32 %v1135, 1.0
        %v1148 = vmul.f32 %v1100, %v1136
        %v1149 = vmul.f32 %v1101, %v1137
        %v1150 = vmul.f32 %v1102, %v1138
        %v1151 = vmul.f32 %v1103, %v1139
        %v1152 = vmul.f32 %v1104, %v1140
        %v1153 = vmul.f32 %v1105, %v1141
        %v1154 = vmul.f32 %v1106, %v1142
        %v1155 = vmul.f32 %v1107, %v1143
        %v1156 = vmul.f32 %v1108, %v1144
        %v1157 = vmul.f32 %v1109, %v1145
        %v1158 = vmul.f32 %v1110, %v1146
        %v1159 = vmul.f32 %v1111, %v1147
        %v1160 = vld [vmem:[%s5] sm:$0xff]
        %1161 = vset.pattern.permute.xlu0 4
        %1162 = vperm.xlu0 %1161, %v274
        %v1163 = vpop.permute.xlu0 %1162
        %vm1165 = vcmask 162816
        %v1167 = vsel %vm1165, %v1160, 0
        %v1170 = vsel %vm660, %v637, 0
        %v1173 = vsel %vm660, %v636, 0
        %v1176 = vsel %vm660, %v635, 0
        %v1179 = vsel %vm660, %v634, 0
        %v1182 = vsel %vm660, %v633, 0
        %v1185 = vsel %vm660, %v638, 0
        %1187 = vmatprep.subr.mxu0 %v1149
        %1188 = vmatpush1.msra.mxu0 %v1148
        %1189 = vmatprep.subr.mxu0 %v1155
        %1190 = vmatpush1.msra.mxu0 %v1154
        %1191 = vmatprep.subr.mxu0 %v1173
        %1192 = vmatpush1.msra.mxu0 %v1170
        %1193 = vmatprep.subr.mxu0 0.0
        %1194 = vmatpush1.msra.mxu0 0.0
        %1195 = vmatprep.subr.mxu0 0.0
        %1196 = vmatpush1.msra.mxu0 0.0
        %1197 = vmatprep.subr.mxu0 0.0
        %1198 = vmatpush1.msra.mxu0 0.0
        %1199 = vmatprep.subr.mxu0 0.0
        %1200 = vmatpush1.msra.mxu0 0.0
        %1201 = vmatprep.subr.mxu0 0.0
        %1202 = vmatpush1.msra.mxu0 0.0
        %1203 = vmatprep.subr.mxu0 0.0
        %1204 = vmatpush1.msra.mxu0 0.0
        %1205 = vmatprep.subr.mxu0 0.0
        %1206 = vmatpush1.msra.mxu0 0.0
        %1207 = vmatprep.subr.mxu0 0.0
        %1208 = vmatpush1.msra.mxu0 0.0
        %1209 = vmatprep.subr.mxu0 0.0
        %1210 = vmatpush1.msra.mxu0 0.0
        %1211 = vmatprep.subr.mxu0 0.0
        %1212 = vmatpush1.msra.mxu0 0.0
        %1213 = vmatprep.subr.mxu0 0.0
        %1214 = vmatpush1.msra.mxu0 0.0
        %1215 = vmatprep.subr.mxu0 0.0
        %1216 = vmatpush1.msra.mxu0 0.0
        %1217 = vmatprep.subr.mxu0 0.0
        %1218 = vmatpush1.msra.mxu0 0.0
        %1219 = vmatprep.subr.mxu0 0.0
        %1220 = vmatpush1.msra.mxu0 0.0
        %1221 = vmatprep.subr.mxu0 0.0
        %1222 = vmatpush1.msra.mxu0 0.0
        %1223 = vmatprep.subr.mxu0 0.0
        %1224 = vmatpush1.msra.mxu0 0.0
        %1225 = vmatprep.subr.mxu0 0.0
        %1226 = vmatpush1.msra.mxu0 0.0
        %1227 = vmatprep.subr.mxu0 0.0
        %1228 = vmatpush1.msra.mxu0 0.0
        %1229 = vmatprep.subr.mxu0 0.0
        %1230 = vmatpush1.msra.mxu0 0.0
        %1231 = vmatprep.subr.mxu0 0.0
        %1232 = vmatpush1.msra.mxu0 0.0
        %1233 = vmatprep.subr.mxu0 0.0
        %1234 = vmatpush1.msra.mxu0 0.0
        %1235 = vmatprep.subr.mxu0 0.0
        %1236 = vmatpush1.msra.mxu0 0.0
        %1237 = vmatprep.subr.mxu0 0.0
        %1238 = vmatpush1.msra.mxu0 0.0
        %1239 = vmatprep.subr.mxu0 0.0
        %1240 = vmatpush1.msra.mxu0 0.0
        %1241 = vmatprep.subr.mxu0 0.0
        %1242 = vmatpush1.msra.mxu0 0.0
        %1243 = vmatprep.subr.mxu0 0.0
        %1244 = vmatpush1.msra.mxu0 0.0
        %1245 = vmatprep.subr.mxu0 0.0
        %1246 = vmatpush1.msra.mxu0 0.0
        %1247 = vmatprep.subr.mxu0 0.0
        %1248 = vmatpush1.msra.mxu0 0.0
        %1249 = vmatprep.subr.mxu0 0.0
        %1250 = vmatpush1.msra.mxu0 0.0
        %1251 = vmatprep.mubr.f32.mxu0 0.0
        %1252 = vmatmul.mubr.f32.gmra.mrb[0].mxu0 %v1167
        %v1253 = vpop.f32.mrb[0].mxu0
        %v1254 = vadd.f32 %v1163, %v1253
        %v1255 = vpop.f32.mrb[0].mxu0
        %v1256 = vadd.f32 %v1163, %v1255
        %1257 = vdwg.mxu0
        %1258 = vmatprep.subr.mxu0 %v1151
        %1259 = vmatpush1.msra.mxu0 %v1150
        %1260 = vmatprep.subr.mxu0 %v1157
        %1261 = vmatpush1.msra.mxu0 %v1156
        %1262 = vmatprep.subr.mxu0 %v1179
        %1263 = vmatpush1.msra.mxu0 %v1176
        %1264 = vmatprep.subr.mxu0 0.0
        %1265 = vmatpush1.msra.mxu0 0.0
        %1266 = vmatprep.subr.mxu0 0.0
        %1267 = vmatpush1.msra.mxu0 0.0
        %1268 = vmatprep.subr.mxu0 0.0
        %1269 = vmatpush1.msra.mxu0 0.0
        %1270 = vmatprep.subr.mxu0 0.0
        %1271 = vmatpush1.msra.mxu0 0.0
        %1272 = vmatprep.subr.mxu0 0.0
        %1273 = vmatpush1.msra.mxu0 0.0
        %1274 = vmatprep.subr.mxu0 0.0
        %1275 = vmatpush1.msra.mxu0 0.0
        %1276 = vmatprep.subr.mxu0 0.0
        %1277 = vmatpush1.msra.mxu0 0.0
        %1278 = vmatprep.subr.mxu0 0.0
        %1279 = vmatpush1.msra.mxu0 0.0
        %1280 = vmatprep.subr.mxu0 0.0
        %1281 = vmatpush1.msra.mxu0 0.0
        %1282 = vmatprep.subr.mxu0 0.0
        %1283 = vmatpush1.msra.mxu0 0.0
        %1284 = vmatprep.subr.mxu0 0.0
        %1285 = vmatpush1.msra.mxu0 0.0
        %1286 = vmatprep.subr.mxu0 0.0
        %1287 = vmatpush1.msra.mxu0 0.0
        %1288 = vmatprep.subr.mxu0 0.0
        %1289 = vmatpush1.msra.mxu0 0.0
        %1290 = vmatprep.subr.mxu0 0.0
        %1291 = vmatpush1.msra.mxu0 0.0
        %1292 = vmatprep.subr.mxu0 0.0
        %1293 = vmatpush1.msra.mxu0 0.0
        %1294 = vmatprep.subr.mxu0 0.0
        %1295 = vmatpush1.msra.mxu0 0.0
        %1296 = vmatprep.subr.mxu0 0.0
        %1297 = vmatpush1.msra.mxu0 0.0
        %1298 = vmatprep.subr.mxu0 0.0
        %1299 = vmatpush1.msra.mxu0 0.0
        %1300 = vmatprep.subr.mxu0 0.0
        %1301 = vmatpush1.msra.mxu0 0.0
        %1302 = vmatprep.subr.mxu0 0.0
        %1303 = vmatpush1.msra.mxu0 0.0
        %1304 = vmatprep.subr.mxu0 0.0
        %1305 = vmatpush1.msra.mxu0 0.0
        %1306 = vmatprep.subr.mxu0 0.0
        %1307 = vmatpush1.msra.mxu0 0.0
        %1308 = vmatprep.subr.mxu0 0.0
        %1309 = vmatpush1.msra.mxu0 0.0
        %1310 = vmatprep.subr.mxu0 0.0
        %1311 = vmatpush1.msra.mxu0 0.0
        %1312 = vmatprep.subr.mxu0 0.0
        %1313 = vmatpush1.msra.mxu0 0.0
        %1314 = vmatprep.subr.mxu0 0.0
        %1315 = vmatpush1.msra.mxu0 0.0
        %1316 = vmatprep.subr.mxu0 0.0
        %1317 = vmatpush1.msra.mxu0 0.0
        %1318 = vmatprep.subr.mxu0 0.0
        %1319 = vmatpush1.msra.mxu0 0.0
        %1320 = vmatprep.subr.mxu0 0.0
        %1321 = vmatpush1.msra.mxu0 0.0
        %1322 = vmatprep.mubr.f32.mxu0 0.0
        %1323 = vmatmul.mubr.f32.gmra.mrb[0].mxu0 %v1167
        %v1324 = vpop.f32.mrb[0].mxu0
        %v1325 = vadd.f32 %v1163, %v1324
        %v1326 = vpop.f32.mrb[0].mxu0
        %v1327 = vadd.f32 %v1163, %v1326
        %1328 = vdwg.mxu0
        %1329 = vmatprep.subr.mxu0 %v1153
        %1330 = vmatpush1.msra.mxu0 %v1152
        %1331 = vmatprep.subr.mxu0 %v1159
        %1332 = vmatpush1.msra.mxu0 %v1158
        %1333 = vmatprep.subr.mxu0 %v1185
        %1334 = vmatpush1.msra.mxu0 %v1182
        %1335 = vmatprep.subr.mxu0 0.0
        %1336 = vmatpush1.msra.mxu0 0.0
        %1337 = vmatprep.subr.mxu0 0.0
        %1338 = vmatpush1.msra.mxu0 0.0
        %1339 = vmatprep.subr.mxu0 0.0
        %1340 = vmatpush1.msra.mxu0 0.0
        %1341 = vmatprep.subr.mxu0 0.0
        %1342 = vmatpush1.msra.mxu0 0.0
        %1343 = vmatprep.subr.mxu0 0.0
        %1344 = vmatpush1.msra.mxu0 0.0
        %1345 = vmatprep.subr.mxu0 0.0
        %1346 = vmatpush1.msra.mxu0 0.0
        %1347 = vmatprep.subr.mxu0 0.0
        %1348 = vmatpush1.msra.mxu0 0.0
        %1349 = vmatprep.subr.mxu0 0.0
        %1350 = vmatpush1.msra.mxu0 0.0
        %1351 = vmatprep.subr.mxu0 0.0
        %1352 = vmatpush1.msra.mxu0 0.0
        %1353 = vmatprep.subr.mxu0 0.0
        %1354 = vmatpush1.msra.mxu0 0.0
        %1355 = vmatprep.subr.mxu0 0.0
        %1356 = vmatpush1.msra.mxu0 0.0
        %1357 = vmatprep.subr.mxu0 0.0
        %1358 = vmatpush1.msra.mxu0 0.0
        %1359 = vmatprep.subr.mxu0 0.0
        %1360 = vmatpush1.msra.mxu0 0.0
        %1361 = vmatprep.subr.mxu0 0.0
        %1362 = vmatpush1.msra.mxu0 0.0
        %1363 = vmatprep.subr.mxu0 0.0
        %1364 = vmatpush1.msra.mxu0 0.0
        %1365 = vmatprep.subr.mxu0 0.0
        %1366 = vmatpush1.msra.mxu0 0.0
        %1367 = vmatprep.subr.mxu0 0.0
        %1368 = vmatpush1.msra.mxu0 0.0
        %1369 = vmatprep.subr.mxu0 0.0
        %1370 = vmatpush1.msra.mxu0 0.0
        %1371 = vmatprep.subr.mxu0 0.0
        %1372 = vmatpush1.msra.mxu0 0.0
        %1373 = vmatprep.subr.mxu0 0.0
        %1374 = vmatpush1.msra.mxu0 0.0
        %1375 = vmatprep.subr.mxu0 0.0
        %1376 = vmatpush1.msra.mxu0 0.0
        %1377 = vmatprep.subr.mxu0 0.0
        %1378 = vmatpush1.msra.mxu0 0.0
        %1379 = vmatprep.subr.mxu0 0.0
        %1380 = vmatpush1.msra.mxu0 0.0
        %1381 = vmatprep.subr.mxu0 0.0
        %1382 = vmatpush1.msra.mxu0 0.0
        %1383 = vmatprep.subr.mxu0 0.0
        %1384 = vmatpush1.msra.mxu0 0.0
        %1385 = vmatprep.subr.mxu0 0.0
        %1386 = vmatpush1.msra.mxu0 0.0
        %1387 = vmatprep.subr.mxu0 0.0
        %1388 = vmatpush1.msra.mxu0 0.0
        %1389 = vmatprep.subr.mxu0 0.0
        %1390 = vmatpush1.msra.mxu0 0.0
        %1391 = vmatprep.subr.mxu0 0.0
        %1392 = vmatpush1.msra.mxu0 0.0
        %1393 = vmatprep.mubr.f32.mxu0 0.0
        %1394 = vmatmul.mubr.f32.gmra.mrb[0].mxu0 %v1167
        %v1395 = vpop.f32.mrb[0].mxu0
        %v1396 = vadd.f32 %v1163, %v1395
        %v1397 = vpop.f32.mrb[0].mxu0
        %v1398 = vadd.f32 %v1163, %v1397
        %1399 = vdwg.mxu0
        %1400 = vst [vmem:[%s267] sm:$0xff] %v1254
        %1401 = vst [vmem:[%s267 + $0x8] sm:$0xff] %v1256
        %1402 = vst [vmem:[%s267 + $0x10] sm:$0xff] %v1325
        %1403 = vst [vmem:[%s267 + $0x18] sm:$0xff] %v1327
        %1404 = vst [vmem:[%s267 + $0x20] sm:$0xff] %v1396
        %1405 = vst [vmem:[%s267 + $0x28] sm:$0xff] %v1398
        %s1406 = sand.u32 %s162, 1
        %s1407 = scalar_lea.sflag [#allocation4], %s1406
        %s1408 = sand.u32 %s162, 1
        %s1409 = smul.addr %s1408, 48
        %s1410 = scalar_lea.vmem [#allocation5], %s1409
        // Predicated region
        $region49: #{tpu_custom_call.1} parent=43 // pred_check
          %p1411 = pneg %p172
        $region50: #{tpu_custom_call.1} parent=43 // pred_check_branch
          %1413 = sbr.rel (%p1411) target = $region52
        $region51: #{tpu_custom_call.1} parent=43 // pred_region
          %s1414 = smul.u32 6, %s23
          %s1416 = ssub.s32 768, 768
          %1417 = vsyncadd %s1407, %s1416
          %s1418 = smul.addr %s1414, 128
          %s1419 = scalar_lea.hbm %s6, %s1418
          %s1421 = sshll.u32 %s1410, 4
          %s1422 = int_to_ptr.vmem [resolvable:$true] %s1421
          %1424 = dma.vmem_to_hbm [thread:$0]  %s1422, 768, %s1419, %s1407
        $region52: #{tpu_custom_call.1} parent=43 // pred_fallthru
          _
      $region44: #{tpu_custom_call.1} parent=5 // pred_fallthru
        _
      %p1425 = scmp.le.s32.totalorder 2, %s18
      // Predicated region
      $region53: #{tpu_custom_call.1} parent=5 // pred_check
        %p1426 = pneg %p1425
      $region54: #{tpu_custom_call.1} parent=5 // pred_check_branch
        %1428 = sbr.rel (%p1426) target = $region56
      $region55: #{tpu_custom_call.1} parent=5 // pred_region
        %s1429 = ssub.s32 %s18, 2
        // Predicated region
        $region57: #{tpu_custom_call.1} parent=55 // pred_check
          %p1430 = pneg %p178
        $region58: #{tpu_custom_call.1} parent=55 // pred_check_branch
          %1432 = sbr.rel (%p1430) target = $region60
        $region59: #{tpu_custom_call.1} parent=55 // pred_region
          %s1433 = sand.u32 %s163, 1
          %s1434 = scalar_lea.sflag [#allocation4], %s1433
          %s1435 = sand.u32 %s163, 1
          %s1436 = smul.addr %s1435, 48
          %s1437 = scalar_lea.vmem [#allocation5], %s1436
          %1438 = dma.done %s1434, 768
        $region60: #{tpu_custom_call.1} parent=55 // pred_fallthru
          _
      $region56: #{tpu_custom_call.1} parent=5 // pred_fallthru
        _
    $region6: #{tpu_custom_call.1} parent=1 // loop_footer
      %s22 = sadd.s32 1, %s18
    $region7: #{tpu_custom_call.1} parent=1 // loop_footer_branch
      %17 = sbr.rel target = $region3
    $region8: #{tpu_custom_call.1} parent=1 // loop_exit
      _
    %1439 = vsyncpa [#allocation3], 1
    %s1440 = scalar_lea.sflag [#allocation3], 1
    %1441 = vsyncpa %s1440, 1
    %1442 = vsyncpa [#allocation4], 1
    %s1443 = scalar_lea.sflag [#allocation4], 1
    %1444 = vsyncpa %s1443, 1

</llo_original>
